<compile_context>
chip_gen: v5e
topology: v5e:2x2
jax: 0.10.0
libtpu: 0.0.40
codegen_flags: <defaults>
</compile_context>

<pallas_src>
import functools

import jax
import jax.numpy as jnp
from jax import lax
from jax.experimental import pallas as pl
from jax.experimental.pallas import tpu as pltpu


def _lstm_fwd_kernel(xp_ref, whh_ref, o_ref, *, T, Hp):
    """Forward-direction LSTM recurrence over pre-projected inputs.

    xp_ref : (T, B, 4*Hp) f32   x @ W_ih^T + (b_ih + b_hh), gate-padded to Hp
    whh_ref: (Hp, 4*Hp)   bf16  recurrent weight, gate-padded, zero pad rows
    o_ref  : (B, Hp)      f32   final forward hidden state h_{T-1}
    """
    B = o_ref.shape[0]

    def step(t, carry):
        h, c = carry
        # Only the recurrent matmul remains in the loop (MXU, f32 accumulate).
        gates = xp_ref[t] + jnp.dot(
            h.astype(whh_ref.dtype), whh_ref[...],
            preferred_element_type=jnp.float32)
        # PyTorch gate order: i, f, g, o.  Slices are 128-lane aligned.
        i_g = jax.nn.sigmoid(gates[:, 0 * Hp:1 * Hp])
        f_g = jax.nn.sigmoid(gates[:, 1 * Hp:2 * Hp])
        g_g = jnp.tanh(gates[:, 2 * Hp:3 * Hp])
        o_g = jax.nn.sigmoid(gates[:, 3 * Hp:4 * Hp])
        c = f_g * c + i_g * g_g
        h = o_g * jnp.tanh(c)
        return (h, c)

    h0 = jnp.zeros((B, Hp), jnp.float32)
    c0 = jnp.zeros((B, Hp), jnp.float32)
    h_final, _ = lax.fori_loop(0, T, step, (h0, c0), unroll=True)
    o_ref[...] = h_final


def detector_forward(x, params, *, Hp=128):
    """x: (T, B, 1000) float32 -> (B, 1) float32.  Matches Detector.forward."""
    T, B, D = x.shape
    H = params["weight_hh_l0"].shape[1]
    f32 = jnp.float32

    # ---- Hoisted input projection: one big GEMM, bias folded in (P: hoist) ----
    wih_f_t = params["weight_ih_l0"].astype(f32).T                    # (D, 4H)
    b_f = (params["bias_ih_l0"] + params["bias_hh_l0"]).astype(f32)   # (4H,)
    xp = jnp.einsum("tbd,dg->tbg", x.astype(f32), wih_f_t) + b_f      # (T, B, 4H)
    # Gate-pad H -> Hp so each gate occupies a lane-aligned 128-wide block.
    xp = xp.reshape(T, B, 4, H)
    xp = jnp.pad(xp, ((0, 0), (0, 0), (0, 0), (0, Hp - H)))
    xp = xp.reshape(T, B, 4 * Hp)

    # ---- Recurrent weight: gate-padded, zero pad rows, bf16 MXU operand ----
    whh_t = params["weight_hh_l0"].astype(f32).T                      # (H, 4H)
    whh4 = whh_t.reshape(H, 4, H)
    whh4 = jnp.pad(whh4, ((0, Hp - H), (0, 0), (0, Hp - H)))
    whh_p = whh4.reshape(Hp, 4 * Hp).astype(jnp.bfloat16)             # (Hp, 4Hp)

    kernel = functools.partial(_lstm_fwd_kernel, T=T, Hp=Hp)
    h_last = pl.pallas_call(
        kernel,
        out_shape=jax.ShapeDtypeStruct((B, Hp), f32),
        # Single invocation (no grid): whole projection (~T*B*2KB) and the
        # bf16 W_hh (~128KB) are DMA'd to VMEM once; no per-step pipeline.
        in_specs=[
            pl.BlockSpec(memory_space=pltpu.MemorySpace.VMEM),        # x_proj
            pl.BlockSpec(memory_space=pltpu.MemorySpace.VMEM),        # W_hh
        ],
        out_specs=pl.BlockSpec(memory_space=pltpu.MemorySpace.VMEM),  # h_{T-1}
    )(xp, whh_p)
    h_fwd = h_last[:, :H]                                             # (B, H)

    # ---- Reverse direction: first step only (zero init state) ----
    # output[-1]'s backward half is the reverse LSTM's first step on x[T-1];
    # its recurrent term is exactly zero, so W_hh_reverse is not needed.
    b_r = (params["bias_ih_l0_reverse"]
           + params["bias_hh_l0_reverse"]).astype(f32)                # (4H,)
    g_r = x[-1].astype(f32) @ params["weight_ih_l0_reverse"].astype(f32).T + b_r
    i_r = jax.nn.sigmoid(g_r[:, 0:H])
    gg_r = jnp.tanh(g_r[:, 2 * H:3 * H])
    o_r = jax.nn.sigmoid(g_r[:, 3 * H:4 * H])
    h_bwd = o_r * jnp.tanh(i_r * gg_r)                                # (B, H)

    # ---- Classifier (tiny; kept out of the kernel, lane-width-1 output) ----
    last = jnp.concatenate([h_fwd, h_bwd], axis=-1)                   # (B, 2H)
    return (last @ params["classifier_w"].astype(f32).T
            + params["classifier_b"].astype(f32))


# ----------------------------- pure-JAX reference -----------------------------

def _lstm_cell_ref(carry, xt, wih, whh, bih, bhh):
    h, c = carry
    g = xt @ wih.T + bih + h @ whh.T + bhh
    i, f, gg, o = jnp.split(g, 4, axis=-1)
    i, f, o = jax.nn.sigmoid(i), jax.nn.sigmoid(f), jax.nn.sigmoid(o)
    gg = jnp.tanh(gg)
    c = f * c + i * gg
    h = o * jnp.tanh(c)
    return (h, c), h


def detector_reference(x, p):
    """Faithful reimplementation of the PyTorch Detector.forward."""
    T, B, D = x.shape
    H = p["weight_hh_l0"].shape[1]
    zeros = (jnp.zeros((B, H), jnp.float32), jnp.zeros((B, H), jnp.float32))

    _, hs_f = lax.scan(
        lambda c_, xt: _lstm_cell_ref(c_, xt, p["weight_ih_l0"],
                                      p["weight_hh_l0"], p["bias_ih_l0"],
                                      p["bias_hh_l0"]), zeros, x)
    _, hs_b = lax.scan(
        lambda c_, xt: _lstm_cell_ref(c_, xt, p["weight_ih_l0_reverse"],
                                      p["weight_hh_l0_reverse"],
                                      p["bias_ih_l0_reverse"],
                                      p["bias_hh_l0_reverse"]), zeros, x[::-1])
    hs_b = hs_b[::-1]
    output = jnp.concatenate([hs_f, hs_b], axis=-1)   # (T, B, 2H)
    last = output[-1]                                 # (B, 2H)
    return last @ p["classifier_w"].T + p["classifier_b"]


def init_params(key, input_size=1000, h=100):
    """Deterministic synthetic init mirroring PyTorch's default uniform init."""
    k = 1.0 / jnp.sqrt(h)
    kc = 1.0 / jnp.sqrt(2 * h)
    keys = jax.random.split(key, 10)
    u = lambda kk, shape, s: jax.random.uniform(kk, shape, jnp.float32, -s, s)
    return {
        "weight_ih_l0": u(keys[0], (4 * h, input_size), k),
        "weight_hh_l0": u(keys[1], (4 * h, h), k),
        "bias_ih_l0": u(keys[2], (4 * h,), k),
        "bias_hh_l0": u(keys[3], (4 * h,), k),
        "weight_ih_l0_reverse": u(keys[4], (4 * h, input_size), k),
        "weight_hh_l0_reverse": u(keys[5], (4 * h, h), k),
        "bias_ih_l0_reverse": u(keys[6], (4 * h,), k),
        "bias_hh_l0_reverse": u(keys[7], (4 * h,), k),
        "classifier_w": u(keys[8], (1, 2 * h), kc),
        "classifier_b": u(keys[9], (1,), kc),
    }


if __name__ == "__main__":
    key = jax.random.PRNGKey(0)
    T, B, D, H = 8, 2, 1000, 100   # D, H fixed by the module; T, B kept small

    pkey, xkey = jax.random.split(key)
    params = init_params(pkey, input_size=D, h=H)
    x = jax.random.normal(xkey, (T, B, D), jnp.float32)

    fwd = jax.jit(detector_forward)
    y = jax.block_until_ready(fwd(x, params))
    y_ref = jax.block_until_ready(detector_reference(x, params))

    assert y.shape == (B, 1), y.shape
    assert jnp.all(jnp.isfinite(y))
    assert jnp.allclose(y, y_ref, atol=5e-2, rtol=5e-2), (y, y_ref)
    print("KERNEL_OK")
</pallas_src>

<mosaic_0001>
module attributes {stable_mosaic.version = 11 : i64} {
  func.func @_lstm_fwd_kernel(%arg0: memref<8x2x512xf32, #tpu.memory_space<vmem>>, %arg1: memref<128x512xbf16, #tpu.memory_space<vmem>>, %arg2: memref<2x128xf32, #tpu.memory_space<vmem>>) attributes {dimension_semantics = [], scalar_prefetch = 0 : i64, scratch_operands = 0 : i64, tpu.core_type = #tpu.core_type<tc>} {
    %cst = arith.constant 0.000000e+00 : f32
    %0 = vector.broadcast %cst : f32 to vector<2x128xf32>
    %cst_0 = arith.constant 0.000000e+00 : f32
    %1 = vector.broadcast %cst_0 : f32 to vector<2x128xf32>
    %c0_i32 = arith.constant 0 : i32
    %2 = arith.index_cast %c0_i32 : i32 to index
    %c0 = arith.constant 0 : index
    %c0_1 = arith.constant 0 : index
    %3 = vector.load %arg0[%2, %c0, %c0_1] : memref<8x2x512xf32, #tpu.memory_space<vmem>>, vector<1x2x512xf32>
    %4 = vector.shape_cast %3 : vector<1x2x512xf32> to vector<2x512xf32>
    %5 = arith.truncf %0 : vector<2x128xf32> to vector<2x128xbf16>
    %c0_2 = arith.constant 0 : index
    %c0_3 = arith.constant 0 : index
    %6 = vector.load %arg1[%c0_2, %c0_3] : memref<128x512xbf16, #tpu.memory_space<vmem>>, vector<128x512xbf16>
    %cst_4 = arith.constant dense<0.000000e+00> : vector<2x512xf32>
    %7 = tpu.matmul %5, %6, %cst_4 {dimension_numbers = #tpu.dot_dimension_numbers<[1], [0], [0], [1], [0, 0, 1, 1], [], []>} : vector<2x128xbf16>, vector<128x512xbf16>, vector<2x512xf32> -> vector<2x512xf32>
    %8 = arith.addf %4, %7 : vector<2x512xf32>
    %9 = vector.extract_strided_slice %8 {offsets = [0, 0], sizes = [2, 128], strides = [1, 1]} : vector<2x512xf32> to vector<2x128xf32>
    %10 = arith.negf %9 : vector<2x128xf32>
    %11 = math.exp %10 : vector<2x128xf32>
    %cst_5 = arith.constant 1.000000e+00 : f32
    %12 = vector.broadcast %cst_5 : f32 to vector<2x128xf32>
    %13 = arith.addf %12, %11 : vector<2x128xf32>
    %14 = arith.divf %12, %13 : vector<2x128xf32>
    %15 = vector.extract_strided_slice %8 {offsets = [0, 128], sizes = [2, 128], strides = [1, 1]} : vector<2x512xf32> to vector<2x128xf32>
    %16 = arith.negf %15 : vector<2x128xf32>
    %17 = math.exp %16 : vector<2x128xf32>
    %cst_6 = arith.constant 1.000000e+00 : f32
    %18 = vector.broadcast %cst_6 : f32 to vector<2x128xf32>
    %19 = arith.addf %18, %17 : vector<2x128xf32>
    %20 = arith.divf %18, %19 : vector<2x128xf32>
    %21 = vector.extract_strided_slice %8 {offsets = [0, 256], sizes = [2, 128], strides = [1, 1]} : vector<2x512xf32> to vector<2x128xf32>
    %22 = math.tanh %21 : vector<2x128xf32>
    %23 = vector.extract_strided_slice %8 {offsets = [0, 384], sizes = [2, 128], strides = [1, 1]} : vector<2x512xf32> to vector<2x128xf32>
    %24 = arith.negf %23 : vector<2x128xf32>
    %25 = math.exp %24 : vector<2x128xf32>
    %cst_7 = arith.constant 1.000000e+00 : f32
    %26 = vector.broadcast %cst_7 : f32 to vector<2x128xf32>
    %27 = arith.addf %26, %25 : vector<2x128xf32>
    %28 = arith.divf %26, %27 : vector<2x128xf32>
    %29 = arith.mulf %20, %1 : vector<2x128xf32>
    %30 = arith.mulf %14, %22 : vector<2x128xf32>
    %31 = arith.addf %29, %30 : vector<2x128xf32>
    %32 = math.tanh %31 : vector<2x128xf32>
    %33 = arith.mulf %28, %32 : vector<2x128xf32>
    %c1_i32 = arith.constant 1 : i32
    %34 = arith.index_cast %c1_i32 : i32 to index
    %c0_8 = arith.constant 0 : index
    %c0_9 = arith.constant 0 : index
    %35 = vector.load %arg0[%34, %c0_8, %c0_9] : memref<8x2x512xf32, #tpu.memory_space<vmem>>, vector<1x2x512xf32>
    %36 = vector.shape_cast %35 : vector<1x2x512xf32> to vector<2x512xf32>
    %37 = arith.truncf %33 : vector<2x128xf32> to vector<2x128xbf16>
    %c0_10 = arith.constant 0 : index
    %c0_11 = arith.constant 0 : index
    %38 = vector.load %arg1[%c0_10, %c0_11] : memref<128x512xbf16, #tpu.memory_space<vmem>>, vector<128x512xbf16>
    %cst_12 = arith.constant dense<0.000000e+00> : vector<2x512xf32>
    %39 = tpu.matmul %37, %38, %cst_12 {dimension_numbers = #tpu.dot_dimension_numbers<[1], [0], [0], [1], [0, 0, 1, 1], [], []>} : vector<2x128xbf16>, vector<128x512xbf16>, vector<2x512xf32> -> vector<2x512xf32>
    %40 = arith.addf %36, %39 : vector<2x512xf32>
    %41 = vector.extract_strided_slice %40 {offsets = [0, 0], sizes = [2, 128], strides = [1, 1]} : vector<2x512xf32> to vector<2x128xf32>
    %42 = arith.negf %41 : vector<2x128xf32>
    %43 = math.exp %42 : vector<2x128xf32>
    %cst_13 = arith.constant 1.000000e+00 : f32
    %44 = vector.broadcast %cst_13 : f32 to vector<2x128xf32>
    %45 = arith.addf %44, %43 : vector<2x128xf32>
    %46 = arith.divf %44, %45 : vector<2x128xf32>
    %47 = vector.extract_strided_slice %40 {offsets = [0, 128], sizes = [2, 128], strides = [1, 1]} : vector<2x512xf32> to vector<2x128xf32>
    %48 = arith.negf %47 : vector<2x128xf32>
    %49 = math.exp %48 : vector<2x128xf32>
    %cst_14 = arith.constant 1.000000e+00 : f32
    %50 = vector.broadcast %cst_14 : f32 to vector<2x128xf32>
    %51 = arith.addf %50, %49 : vector<2x128xf32>
    %52 = arith.divf %50, %51 : vector<2x128xf32>
    %53 = vector.extract_strided_slice %40 {offsets = [0, 256], sizes = [2, 128], strides = [1, 1]} : vector<2x512xf32> to vector<2x128xf32>
    %54 = math.tanh %53 : vector<2x128xf32>
    %55 = vector.extract_strided_slice %40 {offsets = [0, 384], sizes = [2, 128], strides = [1, 1]} : vector<2x512xf32> to vector<2x128xf32>
    %56 = arith.negf %55 : vector<2x128xf32>
    %57 = math.exp %56 : vector<2x128xf32>
    %cst_15 = arith.constant 1.000000e+00 : f32
    %58 = vector.broadcast %cst_15 : f32 to vector<2x128xf32>
    %59 = arith.addf %58, %57 : vector<2x128xf32>
    %60 = arith.divf %58, %59 : vector<2x128xf32>
    %61 = arith.mulf %52, %31 : vector<2x128xf32>
    %62 = arith.mulf %46, %54 : vector<2x128xf32>
    %63 = arith.addf %61, %62 : vector<2x128xf32>
    %64 = math.tanh %63 : vector<2x128xf32>
    %65 = arith.mulf %60, %64 : vector<2x128xf32>
    %c2_i32 = arith.constant 2 : i32
    %66 = arith.index_cast %c2_i32 : i32 to index
    %c0_16 = arith.constant 0 : index
    %c0_17 = arith.constant 0 : index
    %67 = vector.load %arg0[%66, %c0_16, %c0_17] : memref<8x2x512xf32, #tpu.memory_space<vmem>>, vector<1x2x512xf32>
    %68 = vector.shape_cast %67 : vector<1x2x512xf32> to vector<2x512xf32>
    %69 = arith.truncf %65 : vector<2x128xf32> to vector<2x128xbf16>
    %c0_18 = arith.constant 0 : index
    %c0_19 = arith.constant 0 : index
    %70 = vector.load %arg1[%c0_18, %c0_19] : memref<128x512xbf16, #tpu.memory_space<vmem>>, vector<128x512xbf16>
    %cst_20 = arith.constant dense<0.000000e+00> : vector<2x512xf32>
    %71 = tpu.matmul %69, %70, %cst_20 {dimension_numbers = #tpu.dot_dimension_numbers<[1], [0], [0], [1], [0, 0, 1, 1], [], []>} : vector<2x128xbf16>, vector<128x512xbf16>, vector<2x512xf32> -> vector<2x512xf32>
    %72 = arith.addf %68, %71 : vector<2x512xf32>
    %73 = vector.extract_strided_slice %72 {offsets = [0, 0], sizes = [2, 128], strides = [1, 1]} : vector<2x512xf32> to vector<2x128xf32>
    %74 = arith.negf %73 : vector<2x128xf32>
    %75 = math.exp %74 : vector<2x128xf32>
    %cst_21 = arith.constant 1.000000e+00 : f32
    %76 = vector.broadcast %cst_21 : f32 to vector<2x128xf32>
    %77 = arith.addf %76, %75 : vector<2x128xf32>
    %78 = arith.divf %76, %77 : vector<2x128xf32>
    %79 = vector.extract_strided_slice %72 {offsets = [0, 128], sizes = [2, 128], strides = [1, 1]} : vector<2x512xf32> to vector<2x128xf32>
    %80 = arith.negf %79 : vector<2x128xf32>
    %81 = math.exp %80 : vector<2x128xf32>
    %cst_22 = arith.constant 1.000000e+00 : f32
    %82 = vector.broadcast %cst_22 : f32 to vector<2x128xf32>
    %83 = arith.addf %82, %81 : vector<2x128xf32>
    %84 = arith.divf %82, %83 : vector<2x128xf32>
    %85 = vector.extract_strided_slice %72 {offsets = [0, 256], sizes = [2, 128], strides = [1, 1]} : vector<2x512xf32> to vector<2x128xf32>
    %86 = math.tanh %85 : vector<2x128xf32>
    %87 = vector.extract_strided_slice %72 {offsets = [0, 384], sizes = [2, 128], strides = [1, 1]} : vector<2x512xf32> to vector<2x128xf32>
    %88 = arith.negf %87 : vector<2x128xf32>
    %89 = math.exp %88 : vector<2x128xf32>
    %cst_23 = arith.constant 1.000000e+00 : f32
    %90 = vector.broadcast %cst_23 : f32 to vector<2x128xf32>
    %91 = arith.addf %90, %89 : vector<2x128xf32>
    %92 = arith.divf %90, %91 : vector<2x128xf32>
    %93 = arith.mulf %84, %63 : vector<2x128xf32>
    %94 = arith.mulf %78, %86 : vector<2x128xf32>
    %95 = arith.addf %93, %94 : vector<2x128xf32>
    %96 = math.tanh %95 : vector<2x128xf32>
    %97 = arith.mulf %92, %96 : vector<2x128xf32>
    %c3_i32 = arith.constant 3 : i32
    %98 = arith.index_cast %c3_i32 : i32 to index
    %c0_24 = arith.constant 0 : index
    %c0_25 = arith.constant 0 : index
    %99 = vector.load %arg0[%98, %c0_24, %c0_25] : memref<8x2x512xf32, #tpu.memory_space<vmem>>, vector<1x2x512xf32>
    %100 = vector.shape_cast %99 : vector<1x2x512xf32> to vector<2x512xf32>
    %101 = arith.truncf %97 : vector<2x128xf32> to vector<2x128xbf16>
    %c0_26 = arith.constant 0 : index
    %c0_27 = arith.constant 0 : index
    %102 = vector.load %arg1[%c0_26, %c0_27] : memref<128x512xbf16, #tpu.memory_space<vmem>>, vector<128x512xbf16>
    %cst_28 = arith.constant dense<0.000000e+00> : vector<2x512xf32>
    %103 = tpu.matmul %101, %102, %cst_28 {dimension_numbers = #tpu.dot_dimension_numbers<[1], [0], [0], [1], [0, 0, 1, 1], [], []>} : vector<2x128xbf16>, vector<128x512xbf16>, vector<2x512xf32> -> vector<2x512xf32>
    %104 = arith.addf %100, %103 : vector<2x512xf32>
    %105 = vector.extract_strided_slice %104 {offsets = [0, 0], sizes = [2, 128], strides = [1, 1]} : vector<2x512xf32> to vector<2x128xf32>
    %106 = arith.negf %105 : vector<2x128xf32>
    %107 = math.exp %106 : vector<2x128xf32>
    %cst_29 = arith.constant 1.000000e+00 : f32
    %108 = vector.broadcast %cst_29 : f32 to vector<2x128xf32>
    %109 = arith.addf %108, %107 : vector<2x128xf32>
    %110 = arith.divf %108, %109 : vector<2x128xf32>
    %111 = vector.extract_strided_slice %104 {offsets = [0, 128], sizes = [2, 128], strides = [1, 1]} : vector<2x512xf32> to vector<2x128xf32>
    %112 = arith.negf %111 : vector<2x128xf32>
    %113 = math.exp %112 : vector<2x128xf32>
    %cst_30 = arith.constant 1.000000e+00 : f32
    %114 = vector.broadcast %cst_30 : f32 to vector<2x128xf32>
    %115 = arith.addf %114, %113 : vector<2x128xf32>
    %116 = arith.divf %114, %115 : vector<2x128xf32>
    %117 = vector.extract_strided_slice %104 {offsets = [0, 256], sizes = [2, 128], strides = [1, 1]} : vector<2x512xf32> to vector<2x128xf32>
    %118 = math.tanh %117 : vector<2x128xf32>
    %119 = vector.extract_strided_slice %104 {offsets = [0, 384], sizes = [2, 128], strides = [1, 1]} : vector<2x512xf32> to vector<2x128xf32>
    %120 = arith.negf %119 : vector<2x128xf32>
    %121 = math.exp %120 : vector<2x128xf32>
    %cst_31 = arith.constant 1.000000e+00 : f32
    %122 = vector.broadcast %cst_31 : f32 to vector<2x128xf32>
    %123 = arith.addf %122, %121 : vector<2x128xf32>
    %124 = arith.divf %122, %123 : vector<2x128xf32>
    %125 = arith.mulf %116, %95 : vector<2x128xf32>
    %126 = arith.mulf %110, %118 : vector<2x128xf32>
    %127 = arith.addf %125, %126 : vector<2x128xf32>
    %128 = math.tanh %127 : vector<2x128xf32>
    %129 = arith.mulf %124, %128 : vector<2x128xf32>
    %c4_i32 = arith.constant 4 : i32
    %130 = arith.index_cast %c4_i32 : i32 to index
    %c0_32 = arith.constant 0 : index
    %c0_33 = arith.constant 0 : index
    %131 = vector.load %arg0[%130, %c0_32, %c0_33] : memref<8x2x512xf32, #tpu.memory_space<vmem>>, vector<1x2x512xf32>
    %132 = vector.shape_cast %131 : vector<1x2x512xf32> to vector<2x512xf32>
    %133 = arith.truncf %129 : vector<2x128xf32> to vector<2x128xbf16>
    %c0_34 = arith.constant 0 : index
    %c0_35 = arith.constant 0 : index
    %134 = vector.load %arg1[%c0_34, %c0_35] : memref<128x512xbf16, #tpu.memory_space<vmem>>, vector<128x512xbf16>
    %cst_36 = arith.constant dense<0.000000e+00> : vector<2x512xf32>
    %135 = tpu.matmul %133, %134, %cst_36 {dimension_numbers = #tpu.dot_dimension_numbers<[1], [0], [0], [1], [0, 0, 1, 1], [], []>} : vector<2x128xbf16>, vector<128x512xbf16>, vector<2x512xf32> -> vector<2x512xf32>
    %136 = arith.addf %132, %135 : vector<2x512xf32>
    %137 = vector.extract_strided_slice %136 {offsets = [0, 0], sizes = [2, 128], strides = [1, 1]} : vector<2x512xf32> to vector<2x128xf32>
    %138 = arith.negf %137 : vector<2x128xf32>
    %139 = math.exp %138 : vector<2x128xf32>
    %cst_37 = arith.constant 1.000000e+00 : f32
    %140 = vector.broadcast %cst_37 : f32 to vector<2x128xf32>
    %141 = arith.addf %140, %139 : vector<2x128xf32>
    %142 = arith.divf %140, %141 : vector<2x128xf32>
    %143 = vector.extract_strided_slice %136 {offsets = [0, 128], sizes = [2, 128], strides = [1, 1]} : vector<2x512xf32> to vector<2x128xf32>
    %144 = arith.negf %143 : vector<2x128xf32>
    %145 = math.exp %144 : vector<2x128xf32>
    %cst_38 = arith.constant 1.000000e+00 : f32
    %146 = vector.broadcast %cst_38 : f32 to vector<2x128xf32>
    %147 = arith.addf %146, %145 : vector<2x128xf32>
    %148 = arith.divf %146, %147 : vector<2x128xf32>
    %149 = vector.extract_strided_slice %136 {offsets = [0, 256], sizes = [2, 128], strides = [1, 1]} : vector<2x512xf32> to vector<2x128xf32>
    %150 = math.tanh %149 : vector<2x128xf32>
    %151 = vector.extract_strided_slice %136 {offsets = [0, 384], sizes = [2, 128], strides = [1, 1]} : vector<2x512xf32> to vector<2x128xf32>
    %152 = arith.negf %151 : vector<2x128xf32>
    %153 = math.exp %152 : vector<2x128xf32>
    %cst_39 = arith.constant 1.000000e+00 : f32
    %154 = vector.broadcast %cst_39 : f32 to vector<2x128xf32>
    %155 = arith.addf %154, %153 : vector<2x128xf32>
    %156 = arith.divf %154, %155 : vector<2x128xf32>
    %157 = arith.mulf %148, %127 : vector<2x128xf32>
    %158 = arith.mulf %142, %150 : vector<2x128xf32>
    %159 = arith.addf %157, %158 : vector<2x128xf32>
    %160 = math.tanh %159 : vector<2x128xf32>
    %161 = arith.mulf %156, %160 : vector<2x128xf32>
    %c5_i32 = arith.constant 5 : i32
    %162 = arith.index_cast %c5_i32 : i32 to index
    %c0_40 = arith.constant 0 : index
    %c0_41 = arith.constant 0 : index
    %163 = vector.load %arg0[%162, %c0_40, %c0_41] : memref<8x2x512xf32, #tpu.memory_space<vmem>>, vector<1x2x512xf32>
    %164 = vector.shape_cast %163 : vector<1x2x512xf32> to vector<2x512xf32>
    %165 = arith.truncf %161 : vector<2x128xf32> to vector<2x128xbf16>
    %c0_42 = arith.constant 0 : index
    %c0_43 = arith.constant 0 : index
    %166 = vector.load %arg1[%c0_42, %c0_43] : memref<128x512xbf16, #tpu.memory_space<vmem>>, vector<128x512xbf16>
    %cst_44 = arith.constant dense<0.000000e+00> : vector<2x512xf32>
    %167 = tpu.matmul %165, %166, %cst_44 {dimension_numbers = #tpu.dot_dimension_numbers<[1], [0], [0], [1], [0, 0, 1, 1], [], []>} : vector<2x128xbf16>, vector<128x512xbf16>, vector<2x512xf32> -> vector<2x512xf32>
    %168 = arith.addf %164, %167 : vector<2x512xf32>
    %169 = vector.extract_strided_slice %168 {offsets = [0, 0], sizes = [2, 128], strides = [1, 1]} : vector<2x512xf32> to vector<2x128xf32>
    %170 = arith.negf %169 : vector<2x128xf32>
    %171 = math.exp %170 : vector<2x128xf32>
    %cst_45 = arith.constant 1.000000e+00 : f32
    %172 = vector.broadcast %cst_45 : f32 to vector<2x128xf32>
    %173 = arith.addf %172, %171 : vector<2x128xf32>
    %174 = arith.divf %172, %173 : vector<2x128xf32>
    %175 = vector.extract_strided_slice %168 {offsets = [0, 128], sizes = [2, 128], strides = [1, 1]} : vector<2x512xf32> to vector<2x128xf32>
    %176 = arith.negf %175 : vector<2x128xf32>
    %177 = math.exp %176 : vector<2x128xf32>
    %cst_46 = arith.constant 1.000000e+00 : f32
    %178 = vector.broadcast %cst_46 : f32 to vector<2x128xf32>
    %179 = arith.addf %178, %177 : vector<2x128xf32>
    %180 = arith.divf %178, %179 : vector<2x128xf32>
    %181 = vector.extract_strided_slice %168 {offsets = [0, 256], sizes = [2, 128], strides = [1, 1]} : vector<2x512xf32> to vector<2x128xf32>
    %182 = math.tanh %181 : vector<2x128xf32>
    %183 = vector.extract_strided_slice %168 {offsets = [0, 384], sizes = [2, 128], strides = [1, 1]} : vector<2x512xf32> to vector<2x128xf32>
    %184 = arith.negf %183 : vector<2x128xf32>
    %185 = math.exp %184 : vector<2x128xf32>
    %cst_47 = arith.constant 1.000000e+00 : f32
    %186 = vector.broadcast %cst_47 : f32 to vector<2x128xf32>
    %187 = arith.addf %186, %185 : vector<2x128xf32>
    %188 = arith.divf %186, %187 : vector<2x128xf32>
    %189 = arith.mulf %180, %159 : vector<2x128xf32>
    %190 = arith.mulf %174, %182 : vector<2x128xf32>
    %191 = arith.addf %189, %190 : vector<2x128xf32>
    %192 = math.tanh %191 : vector<2x128xf32>
    %193 = arith.mulf %188, %192 : vector<2x128xf32>
    %c6_i32 = arith.constant 6 : i32
    %194 = arith.index_cast %c6_i32 : i32 to index
    %c0_48 = arith.constant 0 : index
    %c0_49 = arith.constant 0 : index
    %195 = vector.load %arg0[%194, %c0_48, %c0_49] : memref<8x2x512xf32, #tpu.memory_space<vmem>>, vector<1x2x512xf32>
    %196 = vector.shape_cast %195 : vector<1x2x512xf32> to vector<2x512xf32>
    %197 = arith.truncf %193 : vector<2x128xf32> to vector<2x128xbf16>
    %c0_50 = arith.constant 0 : index
    %c0_51 = arith.constant 0 : index
    %198 = vector.load %arg1[%c0_50, %c0_51] : memref<128x512xbf16, #tpu.memory_space<vmem>>, vector<128x512xbf16>
    %cst_52 = arith.constant dense<0.000000e+00> : vector<2x512xf32>
    %199 = tpu.matmul %197, %198, %cst_52 {dimension_numbers = #tpu.dot_dimension_numbers<[1], [0], [0], [1], [0, 0, 1, 1], [], []>} : vector<2x128xbf16>, vector<128x512xbf16>, vector<2x512xf32> -> vector<2x512xf32>
    %200 = arith.addf %196, %199 : vector<2x512xf32>
    %201 = vector.extract_strided_slice %200 {offsets = [0, 0], sizes = [2, 128], strides = [1, 1]} : vector<2x512xf32> to vector<2x128xf32>
    %202 = arith.negf %201 : vector<2x128xf32>
    %203 = math.exp %202 : vector<2x128xf32>
    %cst_53 = arith.constant 1.000000e+00 : f32
    %204 = vector.broadcast %cst_53 : f32 to vector<2x128xf32>
    %205 = arith.addf %204, %203 : vector<2x128xf32>
    %206 = arith.divf %204, %205 : vector<2x128xf32>
    %207 = vector.extract_strided_slice %200 {offsets = [0, 128], sizes = [2, 128], strides = [1, 1]} : vector<2x512xf32> to vector<2x128xf32>
    %208 = arith.negf %207 : vector<2x128xf32>
    %209 = math.exp %208 : vector<2x128xf32>
    %cst_54 = arith.constant 1.000000e+00 : f32
    %210 = vector.broadcast %cst_54 : f32 to vector<2x128xf32>
    %211 = arith.addf %210, %209 : vector<2x128xf32>
    %212 = arith.divf %210, %211 : vector<2x128xf32>
    %213 = vector.extract_strided_slice %200 {offsets = [0, 256], sizes = [2, 128], strides = [1, 1]} : vector<2x512xf32> to vector<2x128xf32>
    %214 = math.tanh %213 : vector<2x128xf32>
    %215 = vector.extract_strided_slice %200 {offsets = [0, 384], sizes = [2, 128], strides = [1, 1]} : vector<2x512xf32> to vector<2x128xf32>
    %216 = arith.negf %215 : vector<2x128xf32>
    %217 = math.exp %216 : vector<2x128xf32>
    %cst_55 = arith.constant 1.000000e+00 : f32
    %218 = vector.broadcast %cst_55 : f32 to vector<2x128xf32>
    %219 = arith.addf %218, %217 : vector<2x128xf32>
    %220 = arith.divf %218, %219 : vector<2x128xf32>
    %221 = arith.mulf %212, %191 : vector<2x128xf32>
    %222 = arith.mulf %206, %214 : vector<2x128xf32>
    %223 = arith.addf %221, %222 : vector<2x128xf32>
    %224 = math.tanh %223 : vector<2x128xf32>
    %225 = arith.mulf %220, %224 : vector<2x128xf32>
    %c7_i32 = arith.constant 7 : i32
    %226 = arith.index_cast %c7_i32 : i32 to index
    %c0_56 = arith.constant 0 : index
    %c0_57 = arith.constant 0 : index
    %227 = vector.load %arg0[%226, %c0_56, %c0_57] : memref<8x2x512xf32, #tpu.memory_space<vmem>>, vector<1x2x512xf32>
    %228 = vector.shape_cast %227 : vector<1x2x512xf32> to vector<2x512xf32>
    %229 = arith.truncf %225 : vector<2x128xf32> to vector<2x128xbf16>
    %c0_58 = arith.constant 0 : index
    %c0_59 = arith.constant 0 : index
    %230 = vector.load %arg1[%c0_58, %c0_59] : memref<128x512xbf16, #tpu.memory_space<vmem>>, vector<128x512xbf16>
    %cst_60 = arith.constant dense<0.000000e+00> : vector<2x512xf32>
    %231 = tpu.matmul %229, %230, %cst_60 {dimension_numbers = #tpu.dot_dimension_numbers<[1], [0], [0], [1], [0, 0, 1, 1], [], []>} : vector<2x128xbf16>, vector<128x512xbf16>, vector<2x512xf32> -> vector<2x512xf32>
    %232 = arith.addf %228, %231 : vector<2x512xf32>
    %233 = vector.extract_strided_slice %232 {offsets = [0, 0], sizes = [2, 128], strides = [1, 1]} : vector<2x512xf32> to vector<2x128xf32>
    %234 = arith.negf %233 : vector<2x128xf32>
    %235 = math.exp %234 : vector<2x128xf32>
    %cst_61 = arith.constant 1.000000e+00 : f32
    %236 = vector.broadcast %cst_61 : f32 to vector<2x128xf32>
    %237 = arith.addf %236, %235 : vector<2x128xf32>
    %238 = arith.divf %236, %237 : vector<2x128xf32>
    %239 = vector.extract_strided_slice %232 {offsets = [0, 128], sizes = [2, 128], strides = [1, 1]} : vector<2x512xf32> to vector<2x128xf32>
    %240 = arith.negf %239 : vector<2x128xf32>
    %241 = math.exp %240 : vector<2x128xf32>
    %cst_62 = arith.constant 1.000000e+00 : f32
    %242 = vector.broadcast %cst_62 : f32 to vector<2x128xf32>
    %243 = arith.addf %242, %241 : vector<2x128xf32>
    %244 = arith.divf %242, %243 : vector<2x128xf32>
    %245 = vector.extract_strided_slice %232 {offsets = [0, 256], sizes = [2, 128], strides = [1, 1]} : vector<2x512xf32> to vector<2x128xf32>
    %246 = math.tanh %245 : vector<2x128xf32>
    %247 = vector.extract_strided_slice %232 {offsets = [0, 384], sizes = [2, 128], strides = [1, 1]} : vector<2x512xf32> to vector<2x128xf32>
    %248 = arith.negf %247 : vector<2x128xf32>
    %249 = math.exp %248 : vector<2x128xf32>
    %cst_63 = arith.constant 1.000000e+00 : f32
    %250 = vector.broadcast %cst_63 : f32 to vector<2x128xf32>
    %251 = arith.addf %250, %249 : vector<2x128xf32>
    %252 = arith.divf %250, %251 : vector<2x128xf32>
    %253 = arith.mulf %244, %223 : vector<2x128xf32>
    %254 = arith.mulf %238, %246 : vector<2x128xf32>
    %255 = arith.addf %253, %254 : vector<2x128xf32>
    %256 = math.tanh %255 : vector<2x128xf32>
    %257 = arith.mulf %252, %256 : vector<2x128xf32>
    %c8_i32 = arith.constant 8 : i32
    %c0_64 = arith.constant 0 : index
    %c0_65 = arith.constant 0 : index
    %258 = vector.load %arg2[%c0_64, %c0_65] : memref<2x128xf32, #tpu.memory_space<vmem>>, vector<2x128xf32>
    tpu.vector_store %arg2[%c0_64, %c0_65], %257 {strides = array<i32>} : memref<2x128xf32, #tpu.memory_space<vmem>>, vector<2x128xf32>,
    return
  }
}

</mosaic_0001>

<llo_original>
// kernel: detector_forward.1
$region0: #{detector_forward.1}
  #allocation0 [shape = 'u32[]', space=smem, size = 0x4, offset = 0x4, fixed_abs, tag = 'smem constant byte address 0x4 - core index']
  #allocation1 [shape = 'u32[72,128]{1,0:T(1,128)}', space=vmem, size = 0x9000, scoped, tag = 'internal scratch']
  %s0 = inlined_call_operand.vmem [shape: f32[8,2,512], index: 0, kind: input, shape index: {}]
  %s1 = inlined_call_operand.vmem [shape: bf16[128,512], index: 1, kind: input, shape index: {}]
  %s2 = inlined_call_operand.vmem [shape: f32[2,128], index: 2, kind: output, shape index: {}]
  %s3 = sld [smem:[#allocation0]]
  $region18: #{detector_forward.1} parent=0
    _
  %s5 = ssub.s32 1, %s3
  %s6 = scalar_select 0, %s5, %s3
  // Predicated region
  $region2: #{detector_forward.1} parent=0 // pred_check
    _
  $region3: #{detector_forward.1} parent=0 // pred_check_branch
    %8 = sbr.rel (0) target = $region5
  $region4: #{detector_forward.1} parent=0 // pred_region
    _
  $region5: #{detector_forward.1} parent=0 // pred_fallthru
    _
  // Predicated region
  $region6: #{detector_forward.1} parent=0 // pred_check
    _
  $region7: #{detector_forward.1} parent=0 // pred_check_branch
    %10 = sbr.rel (0) target = $region9
  $region8: #{detector_forward.1} parent=0 // pred_region
    _
  $region9: #{detector_forward.1} parent=0 // pred_fallthru
    _
  %v12 = vld [vmem:[%s0] sm:$0xff]
  %v13 = vld [vmem:[%s1] sm:$0xff]
  %v14 = vld [vmem:[%s1 + $0x8] sm:$0xff]
  %v15 = vld [vmem:[%s1 + $0x10] sm:$0xff]
  %v16 = vld [vmem:[%s1 + $0x18] sm:$0xff]
  %v17 = vld [vmem:[%s1 + $0x20] sm:$0xff]
  %v18 = vld [vmem:[%s1 + $0x28] sm:$0xff]
  %v19 = vld [vmem:[%s1 + $0x30] sm:$0xff]
  %v20 = vld [vmem:[%s1 + $0x38] sm:$0xff]
  %v21 = vld [vmem:[%s1 + $0x40] sm:$0xff]
  %v22 = vld [vmem:[%s1 + $0x48] sm:$0xff]
  %v23 = vld [vmem:[%s1 + $0x50] sm:$0xff]
  %v24 = vld [vmem:[%s1 + $0x58] sm:$0xff]
  %v25 = vld [vmem:[%s1 + $0x60] sm:$0xff]
  %v26 = vld [vmem:[%s1 + $0x68] sm:$0xff]
  %v27 = vld [vmem:[%s1 + $0x70] sm:$0xff]
  %v28 = vld [vmem:[%s1 + $0x78] sm:$0xff]
  %v29 = vld [vmem:[%s1 + $0x80] sm:$0xff]
  %v30 = vld [vmem:[%s1 + $0x88] sm:$0xff]
  %v31 = vld [vmem:[%s1 + $0x90] sm:$0xff]
  %v32 = vld [vmem:[%s1 + $0x98] sm:$0xff]
  %v33 = vld [vmem:[%s1 + $0xa0] sm:$0xff]
  %v34 = vld [vmem:[%s1 + $0xa8] sm:$0xff]
  %v35 = vld [vmem:[%s1 + $0xb0] sm:$0xff]
  %v36 = vld [vmem:[%s1 + $0xb8] sm:$0xff]
  %v37 = vld [vmem:[%s1 + $0xc0] sm:$0xff]
  %v38 = vld [vmem:[%s1 + $0xc8] sm:$0xff]
  %v39 = vld [vmem:[%s1 + $0xd0] sm:$0xff]
  %v40 = vld [vmem:[%s1 + $0xd8] sm:$0xff]
  %v41 = vld [vmem:[%s1 + $0xe0] sm:$0xff]
  %v42 = vld [vmem:[%s1 + $0xe8] sm:$0xff]
  %v43 = vld [vmem:[%s1 + $0xf0] sm:$0xff]
  %v44 = vld [vmem:[%s1 + $0xf8] sm:$0xff]
  %v77 = vunpack.c.l.b16 %v13
  %v78 = vunpack.c.h.b16 %v13
  %v79 = vunpack.c.l.b16 %v14
  %v80 = vunpack.c.h.b16 %v14
  %v81 = vunpack.c.l.b16 %v15
  %v82 = vunpack.c.h.b16 %v15
  %v83 = vunpack.c.l.b16 %v16
  %v84 = vunpack.c.h.b16 %v16
  %v85 = vunpack.c.l.b16 %v17
  %v86 = vunpack.c.h.b16 %v17
  %v87 = vunpack.c.l.b16 %v18
  %v88 = vunpack.c.h.b16 %v18
  %v89 = vunpack.c.l.b16 %v19
  %v90 = vunpack.c.h.b16 %v19
  %v91 = vunpack.c.l.b16 %v20
  %v92 = vunpack.c.h.b16 %v20
  %v93 = vunpack.c.l.b16 %v21
  %v94 = vunpack.c.h.b16 %v21
  %v95 = vunpack.c.l.b16 %v22
  %v96 = vunpack.c.h.b16 %v22
  %v97 = vunpack.c.l.b16 %v23
  %v98 = vunpack.c.h.b16 %v23
  %v99 = vunpack.c.l.b16 %v24
  %v100 = vunpack.c.h.b16 %v24
  %v101 = vunpack.c.l.b16 %v25
  %v102 = vunpack.c.h.b16 %v25
  %v103 = vunpack.c.l.b16 %v26
  %v104 = vunpack.c.h.b16 %v26
  %v105 = vunpack.c.l.b16 %v27
  %v106 = vunpack.c.h.b16 %v27
  %v107 = vunpack.c.l.b16 %v28
  %v108 = vunpack.c.h.b16 %v28
  %v109 = vunpack.c.l.b16 %v29
  %v110 = vunpack.c.h.b16 %v29
  %v111 = vunpack.c.l.b16 %v30
  %v112 = vunpack.c.h.b16 %v30
  %v113 = vunpack.c.l.b16 %v31
  %v114 = vunpack.c.h.b16 %v31
  %v115 = vunpack.c.l.b16 %v32
  %v116 = vunpack.c.h.b16 %v32
  %v117 = vunpack.c.l.b16 %v33
  %v118 = vunpack.c.h.b16 %v33
  %v119 = vunpack.c.l.b16 %v34
  %v120 = vunpack.c.h.b16 %v34
  %v121 = vunpack.c.l.b16 %v35
  %v122 = vunpack.c.h.b16 %v35
  %v123 = vunpack.c.l.b16 %v36
  %v124 = vunpack.c.h.b16 %v36
  %v125 = vunpack.c.l.b16 %v37
  %v126 = vunpack.c.h.b16 %v37
  %v127 = vunpack.c.l.b16 %v38
  %v128 = vunpack.c.h.b16 %v38
  %v129 = vunpack.c.l.b16 %v39
  %v130 = vunpack.c.h.b16 %v39
  %v131 = vunpack.c.l.b16 %v40
  %v132 = vunpack.c.h.b16 %v40
  %v133 = vunpack.c.l.b16 %v41
  %v134 = vunpack.c.h.b16 %v41
  %v135 = vunpack.c.l.b16 %v42
  %v136 = vunpack.c.h.b16 %v42
  %v137 = vunpack.c.l.b16 %v43
  %v138 = vunpack.c.h.b16 %v43
  %v139 = vunpack.c.l.b16 %v44
  %v140 = vunpack.c.h.b16 %v44
  %v141 = vpack.c.b16 %v81, %v77
  %v142 = vpack.c.b16 %v82, %v78
  %v143 = vpack.c.b16 %v83, %v79
  %v144 = vpack.c.b16 %v84, %v80
  %v145 = vpack.c.b16 %v89, %v85
  %v146 = vpack.c.b16 %v90, %v86
  %v147 = vpack.c.b16 %v91, %v87
  %v148 = vpack.c.b16 %v92, %v88
  %v149 = vpack.c.b16 %v97, %v93
  %v150 = vpack.c.b16 %v98, %v94
  %v151 = vpack.c.b16 %v99, %v95
  %v152 = vpack.c.b16 %v100, %v96
  %v153 = vpack.c.b16 %v105, %v101
  %v154 = vpack.c.b16 %v106, %v102
  %v155 = vpack.c.b16 %v107, %v103
  %v156 = vpack.c.b16 %v108, %v104
  %v157 = vpack.c.b16 %v113, %v109
  %v158 = vpack.c.b16 %v114, %v110
  %v159 = vpack.c.b16 %v115, %v111
  %v160 = vpack.c.b16 %v116, %v112
  %v161 = vpack.c.b16 %v121, %v117
  %v162 = vpack.c.b16 %v122, %v118
  %v163 = vpack.c.b16 %v123, %v119
  %v164 = vpack.c.b16 %v124, %v120
  %v165 = vpack.c.b16 %v129, %v125
  %v166 = vpack.c.b16 %v130, %v126
  %v167 = vpack.c.b16 %v131, %v127
  %v168 = vpack.c.b16 %v132, %v128
  %v169 = vpack.c.b16 %v137, %v133
  %v170 = vpack.c.b16 %v138, %v134
  %v171 = vpack.c.b16 %v139, %v135
  %v172 = vpack.c.b16 %v140, %v136
  %205 = vmatpush.bf16.msra.mxu0 %v169
  %206 = vmatpush.bf16.msra.mxu0 %v165
  %207 = vmatpush.bf16.msra.mxu0 %v161
  %208 = vmatpush.bf16.msra.mxu0 %v157
  %209 = vmatpush.bf16.msra.mxu0 %v153
  %210 = vmatpush.bf16.msra.mxu0 %v149
  %211 = vmatpush.bf16.msra.mxu0 %v145
  %212 = vmatpush.bf16.msra.mxu0 %v141
  %213 = vmatmul.bf16.gmra.mxu0 0
  %v214 = vpop.f32.mrf.mxu0
  %v215 = vadd.f32 0.0, %v214
  %v216 = vpop.f32.mrf.mxu0
  %217 = vdwg.mxu0
  %218 = vmatpush.bf16.msra.mxu0 %v170
  %219 = vmatpush.bf16.msra.mxu0 %v166
  %220 = vmatpush.bf16.msra.mxu0 %v162
  %221 = vmatpush.bf16.msra.mxu0 %v158
  %222 = vmatpush.bf16.msra.mxu0 %v154
  %223 = vmatpush.bf16.msra.mxu0 %v150
  %224 = vmatpush.bf16.msra.mxu0 %v146
  %225 = vmatpush.bf16.msra.mxu0 %v142
  %226 = vmatmul.bf16.gmra.mxu0 0
  %v227 = vpop.f32.mrf.mxu0
  %v228 = vadd.f32 0.0, %v227
  %v229 = vpop.f32.mrf.mxu0
  %230 = vdwg.mxu0
  %231 = vmatpush.bf16.msra.mxu0 %v171
  %232 = vmatpush.bf16.msra.mxu0 %v167
  %233 = vmatpush.bf16.msra.mxu0 %v163
  %234 = vmatpush.bf16.msra.mxu0 %v159
  %235 = vmatpush.bf16.msra.mxu0 %v155
  %236 = vmatpush.bf16.msra.mxu0 %v151
  %237 = vmatpush.bf16.msra.mxu0 %v147
  %238 = vmatpush.bf16.msra.mxu0 %v143
  %239 = vmatmul.bf16.gmra.mxu0 0
  %v240 = vpop.f32.mrf.mxu0
  %v241 = vadd.f32 0.0, %v240
  %v242 = vpop.f32.mrf.mxu0
  %243 = vdwg.mxu0
  %244 = vmatpush.bf16.msra.mxu0 %v172
  %245 = vmatpush.bf16.msra.mxu0 %v168
  %246 = vmatpush.bf16.msra.mxu0 %v164
  %247 = vmatpush.bf16.msra.mxu0 %v160
  %248 = vmatpush.bf16.msra.mxu0 %v156
  %249 = vmatpush.bf16.msra.mxu0 %v152
  %250 = vmatpush.bf16.msra.mxu0 %v148
  %251 = vmatpush.bf16.msra.mxu0 %v144
  %252 = vmatmul.bf16.gmra.mxu0 0
  %v253 = vpop.f32.mrf.mxu0
  %v254 = vadd.f32 0.0, %v253
  %v255 = vpop.f32.mrf.mxu0
  %256 = vdwg.mxu0
  %v261 = vrot.slane %v228, 6
  %v262 = vrot.slane %v241, 4
  %v263 = vrot.slane %v254, 2
  %vm264 = vcmask 1041408
  %v265 = vsel %vm264, %v215, %v261
  %vm266 = vcmask 1045508
  %v267 = vsel %vm266, %v262, %v263
  %vm268 = vcmask 1043456
  %v269 = vsel %vm268, %v265, %v267
  %v271 = vadd.f32 %v12, %v269
  %v272 = vxor.u32 %v271, 2147483648
  %v273 = vmul.f32 %v272, 1.442695
  %v274 = vpow.pop %v273
  %v275 = vadd.f32 %v274, 1.0
  %v276 = vrcp.pop %v275
  %v277 = vmul.f32 %v275, %v276
  %v278 = vsub.f32 1.0, %v277
  %v279 = vmul.f32 %v276, %v278
  %v280 = vadd.f32 %v276, %v279
  %vm281 = vweird.f32 %v275
  %vm282 = vweird.f32 %v276
  %vm283 = vmor %vm281, %vm282
  %v284 = vsel %vm283, %v276, %v280
  %v285 = vand.u32 2147483647, %v275
  %vm286 = vcmp.eq.f32.partialorder %v285, 8.507059e+37
  %v287 = vand.u32 %v275, 2147483648
  %v288 = vor.u32 1.1754944e-38, %v287
  %v289 = vsel %vm286, %v288, %v284
  %v290 = vmul.f32 1.0, %v289
  %v292 = vrot.slane %v271, 2
  %v294 = vxor.u32 %v292, 2147483648
  %v295 = vmul.f32 %v294, 1.442695
  %v296 = vpow.pop %v295
  %v297 = vadd.f32 %v296, 1.0
  %v298 = vrcp.pop %v297
  %v299 = vmul.f32 %v297, %v298
  %v300 = vsub.f32 1.0, %v299
  %v301 = vmul.f32 %v298, %v300
  %v302 = vadd.f32 %v298, %v301
  %vm303 = vweird.f32 %v297
  %vm304 = vweird.f32 %v298
  %vm305 = vmor %vm303, %vm304
  %v306 = vsel %vm305, %v298, %v302
  %v307 = vand.u32 2147483647, %v297
  %vm308 = vcmp.eq.f32.partialorder %v307, 8.507059e+37
  %v309 = vand.u32 %v297, 2147483648
  %v310 = vor.u32 1.1754944e-38, %v309
  %v311 = vsel %vm308, %v310, %v306
  %v312 = vmul.f32 1.0, %v311
  %v313 = vrot.slane %v271, 4
  %v315 = vtanh.pop %v313
  %v316 = vrot.slane %v271, 6
  %v318 = vxor.u32 %v316, 2147483648
  %v319 = vmul.f32 %v318, 1.442695
  %v320 = vpow.pop %v319
  %v321 = vadd.f32 %v320, 1.0
  %v322 = vrcp.pop %v321
  %v323 = vmul.f32 %v321, %v322
  %v324 = vsub.f32 1.0, %v323
  %v325 = vmul.f32 %v322, %v324
  %v326 = vadd.f32 %v322, %v325
  %vm327 = vweird.f32 %v321
  %vm328 = vweird.f32 %v322
  %vm329 = vmor %vm327, %vm328
  %v330 = vsel %vm329, %v322, %v326
  %v331 = vand.u32 2147483647, %v321
  %vm332 = vcmp.eq.f32.partialorder %v331, 8.507059e+37
  %v333 = vand.u32 %v321, 2147483648
  %v334 = vor.u32 1.1754944e-38, %v333
  %v335 = vsel %vm332, %v334, %v330
  %v336 = vmul.f32 1.0, %v335
  %v337 = vmul.f32 %v312, 0.0
  %v338 = vmul.f32 %v290, %v315
  %v339 = vadd.f32 %v337, %v338
  %v340 = vtanh.pop %v339
  %v341 = vmul.f32 %v336, %v340
  %s342 = scalar_lea.vmem %s0, 8
  %v343 = vld [vmem:[%s342] sm:$0xff]
  %v344 = vpack.c.bf16 %v341, %v341
  %345 = vmatpush.bf16.msra.mxu0 %v169
  %346 = vmatpush.bf16.msra.mxu0 %v165
  %347 = vmatpush.bf16.msra.mxu0 %v161
  %348 = vmatpush.bf16.msra.mxu0 %v157
  %349 = vmatpush.bf16.msra.mxu0 %v153
  %350 = vmatpush.bf16.msra.mxu0 %v149
  %351 = vmatpush.bf16.msra.mxu0 %v145
  %352 = vmatpush.bf16.msra.mxu0 %v141
  %353 = vmatmul.bf16.gmra.mxu0 %v344
  %v354 = vpop.f32.mrf.mxu0
  %v355 = vadd.f32 0.0, %v354
  %v356 = vpop.f32.mrf.mxu0
  %357 = vdwg.mxu0
  %358 = vmatpush.bf16.msra.mxu0 %v170
  %359 = vmatpush.bf16.msra.mxu0 %v166
  %360 = vmatpush.bf16.msra.mxu0 %v162
  %361 = vmatpush.bf16.msra.mxu0 %v158
  %362 = vmatpush.bf16.msra.mxu0 %v154
  %363 = vmatpush.bf16.msra.mxu0 %v150
  %364 = vmatpush.bf16.msra.mxu0 %v146
  %365 = vmatpush.bf16.msra.mxu0 %v142
  %366 = vmatmul.bf16.gmra.mxu0 %v344
  %v367 = vpop.f32.mrf.mxu0
  %v368 = vadd.f32 0.0, %v367
  %v369 = vpop.f32.mrf.mxu0
  %370 = vdwg.mxu0
  %371 = vmatpush.bf16.msra.mxu0 %v171
  %372 = vmatpush.bf16.msra.mxu0 %v167
  %373 = vmatpush.bf16.msra.mxu0 %v163
  %374 = vmatpush.bf16.msra.mxu0 %v159
  %375 = vmatpush.bf16.msra.mxu0 %v155
  %376 = vmatpush.bf16.msra.mxu0 %v151
  %377 = vmatpush.bf16.msra.mxu0 %v147
  %378 = vmatpush.bf16.msra.mxu0 %v143
  %379 = vmatmul.bf16.gmra.mxu0 %v344
  %v380 = vpop.f32.mrf.mxu0
  %v381 = vadd.f32 0.0, %v380
  %v382 = vpop.f32.mrf.mxu0
  %383 = vdwg.mxu0
  %384 = vmatpush.bf16.msra.mxu0 %v172
  %385 = vmatpush.bf16.msra.mxu0 %v168
  %386 = vmatpush.bf16.msra.mxu0 %v164
  %387 = vmatpush.bf16.msra.mxu0 %v160
  %388 = vmatpush.bf16.msra.mxu0 %v156
  %389 = vmatpush.bf16.msra.mxu0 %v152
  %390 = vmatpush.bf16.msra.mxu0 %v148
  %391 = vmatpush.bf16.msra.mxu0 %v144
  %392 = vmatmul.bf16.gmra.mxu0 %v344
  %v393 = vpop.f32.mrf.mxu0
  %v394 = vadd.f32 0.0, %v393
  %v395 = vpop.f32.mrf.mxu0
  %396 = vdwg.mxu0
  %v401 = vrot.slane %v368, 6
  %v402 = vrot.slane %v381, 4
  %v403 = vrot.slane %v394, 2
  %v404 = vsel %vm264, %v355, %v401
  %v405 = vsel %vm266, %v402, %v403
  %v406 = vsel %vm268, %v404, %v405
  %v408 = vadd.f32 %v343, %v406
  %v409 = vxor.u32 %v408, 2147483648
  %v410 = vmul.f32 %v409, 1.442695
  %v411 = vpow.pop %v410
  %v412 = vadd.f32 %v411, 1.0
  %v413 = vrcp.pop %v412
  %v414 = vmul.f32 %v412, %v413
  %v415 = vsub.f32 1.0, %v414
  %v416 = vmul.f32 %v413, %v415
  %v417 = vadd.f32 %v413, %v416
  %vm418 = vweird.f32 %v412
  %vm419 = vweird.f32 %v413
  %vm420 = vmor %vm418, %vm419
  %v421 = vsel %vm420, %v413, %v417
  %v422 = vand.u32 2147483647, %v412
  %vm423 = vcmp.eq.f32.partialorder %v422, 8.507059e+37
  %v424 = vand.u32 %v412, 2147483648
  %v425 = vor.u32 1.1754944e-38, %v424
  %v426 = vsel %vm423, %v425, %v421
  %v427 = vmul.f32 1.0, %v426
  %v429 = vrot.slane %v408, 2
  %v431 = vxor.u32 %v429, 2147483648
  %v432 = vmul.f32 %v431, 1.442695
  %v433 = vpow.pop %v432
  %v434 = vadd.f32 %v433, 1.0
  %v435 = vrcp.pop %v434
  %v436 = vmul.f32 %v434, %v435
  %v437 = vsub.f32 1.0, %v436
  %v438 = vmul.f32 %v435, %v437
  %v439 = vadd.f32 %v435, %v438
  %vm440 = vweird.f32 %v434
  %vm441 = vweird.f32 %v435
  %vm442 = vmor %vm440, %vm441
  %v443 = vsel %vm442, %v435, %v439
  %v444 = vand.u32 2147483647, %v434
  %vm445 = vcmp.eq.f32.partialorder %v444, 8.507059e+37
  %v446 = vand.u32 %v434, 2147483648
  %v447 = vor.u32 1.1754944e-38, %v446
  %v448 = vsel %vm445, %v447, %v443
  %v449 = vmul.f32 1.0, %v448
  %v450 = vrot.slane %v408, 4
  %v452 = vtanh.pop %v450
  %v453 = vrot.slane %v408, 6
  %v455 = vxor.u32 %v453, 2147483648
  %v456 = vmul.f32 %v455, 1.442695
  %v457 = vpow.pop %v456
  %v458 = vadd.f32 %v457, 1.0
  %v459 = vrcp.pop %v458
  %v460 = vmul.f32 %v458, %v459
  %v461 = vsub.f32 1.0, %v460
  %v462 = vmul.f32 %v459, %v461
  %v463 = vadd.f32 %v459, %v462
  %vm464 = vweird.f32 %v458
  %vm465 = vweird.f32 %v459
  %vm466 = vmor %vm464, %vm465
  %v467 = vsel %vm466, %v459, %v463
  %v468 = vand.u32 2147483647, %v458
  %vm469 = vcmp.eq.f32.partialorder %v468, 8.507059e+37
  %v470 = vand.u32 %v458, 2147483648
  %v471 = vor.u32 1.1754944e-38, %v470
  %v472 = vsel %vm469, %v471, %v467
  %v473 = vmul.f32 1.0, %v472
  %v474 = vmul.f32 %v449, %v339
  %v475 = vmul.f32 %v427, %v452
  %v476 = vadd.f32 %v474, %v475
  %v477 = vtanh.pop %v476
  %v478 = vmul.f32 %v473, %v477
  %s479 = scalar_lea.vmem %s0, 16
  %v480 = vld [vmem:[%s479] sm:$0xff]
  %v481 = vpack.c.bf16 %v478, %v478
  %482 = vmatpush.bf16.msra.mxu0 %v169
  %483 = vmatpush.bf16.msra.mxu0 %v165
  %484 = vmatpush.bf16.msra.mxu0 %v161
  %485 = vmatpush.bf16.msra.mxu0 %v157
  %486 = vmatpush.bf16.msra.mxu0 %v153
  %487 = vmatpush.bf16.msra.mxu0 %v149
  %488 = vmatpush.bf16.msra.mxu0 %v145
  %489 = vmatpush.bf16.msra.mxu0 %v141
  %490 = vmatmul.bf16.gmra.mxu0 %v481
  %v491 = vpop.f32.mrf.mxu0
  %v492 = vadd.f32 0.0, %v491
  %v493 = vpop.f32.mrf.mxu0
  %494 = vdwg.mxu0
  %495 = vmatpush.bf16.msra.mxu0 %v170
  %496 = vmatpush.bf16.msra.mxu0 %v166
  %497 = vmatpush.bf16.msra.mxu0 %v162
  %498 = vmatpush.bf16.msra.mxu0 %v158
  %499 = vmatpush.bf16.msra.mxu0 %v154
  %500 = vmatpush.bf16.msra.mxu0 %v150
  %501 = vmatpush.bf16.msra.mxu0 %v146
  %502 = vmatpush.bf16.msra.mxu0 %v142
  %503 = vmatmul.bf16.gmra.mxu0 %v481
  %v504 = vpop.f32.mrf.mxu0
  %v505 = vadd.f32 0.0, %v504
  %v506 = vpop.f32.mrf.mxu0
  %507 = vdwg.mxu0
  %508 = vmatpush.bf16.msra.mxu0 %v171
  %509 = vmatpush.bf16.msra.mxu0 %v167
  %510 = vmatpush.bf16.msra.mxu0 %v163
  %511 = vmatpush.bf16.msra.mxu0 %v159
  %512 = vmatpush.bf16.msra.mxu0 %v155
  %513 = vmatpush.bf16.msra.mxu0 %v151
  %514 = vmatpush.bf16.msra.mxu0 %v147
  %515 = vmatpush.bf16.msra.mxu0 %v143
  %516 = vmatmul.bf16.gmra.mxu0 %v481
  %v517 = vpop.f32.mrf.mxu0
  %v518 = vadd.f32 0.0, %v517
  %v519 = vpop.f32.mrf.mxu0
  %520 = vdwg.mxu0
  %521 = vmatpush.bf16.msra.mxu0 %v172
  %522 = vmatpush.bf16.msra.mxu0 %v168
  %523 = vmatpush.bf16.msra.mxu0 %v164
  %524 = vmatpush.bf16.msra.mxu0 %v160
  %525 = vmatpush.bf16.msra.mxu0 %v156
  %526 = vmatpush.bf16.msra.mxu0 %v152
  %527 = vmatpush.bf16.msra.mxu0 %v148
  %528 = vmatpush.bf16.msra.mxu0 %v144
  %529 = vmatmul.bf16.gmra.mxu0 %v481
  %v530 = vpop.f32.mrf.mxu0
  %v531 = vadd.f32 0.0, %v530
  %v532 = vpop.f32.mrf.mxu0
  %533 = vdwg.mxu0
  %v538 = vrot.slane %v505, 6
  %v539 = vrot.slane %v518, 4
  %v540 = vrot.slane %v531, 2
  %v541 = vsel %vm264, %v492, %v538
  %v542 = vsel %vm266, %v539, %v540
  %v543 = vsel %vm268, %v541, %v542
  %v545 = vadd.f32 %v480, %v543
  %v546 = vxor.u32 %v545, 2147483648
  %v547 = vmul.f32 %v546, 1.442695
  %v548 = vpow.pop %v547
  %v549 = vadd.f32 %v548, 1.0
  %v550 = vrcp.pop %v549
  %v551 = vmul.f32 %v549, %v550
  %v552 = vsub.f32 1.0, %v551
  %v553 = vmul.f32 %v550, %v552
  %v554 = vadd.f32 %v550, %v553
  %vm555 = vweird.f32 %v549
  %vm556 = vweird.f32 %v550
  %vm557 = vmor %vm555, %vm556
  %v558 = vsel %vm557, %v550, %v554
  %v559 = vand.u32 2147483647, %v549
  %vm560 = vcmp.eq.f32.partialorder %v559, 8.507059e+37
  %v561 = vand.u32 %v549, 2147483648
  %v562 = vor.u32 1.1754944e-38, %v561
  %v563 = vsel %vm560, %v562, %v558
  %v564 = vmul.f32 1.0, %v563
  %v566 = vrot.slane %v545, 2
  %v568 = vxor.u32 %v566, 2147483648
  %v569 = vmul.f32 %v568, 1.442695
  %v570 = vpow.pop %v569
  %v571 = vadd.f32 %v570, 1.0
  %v572 = vrcp.pop %v571
  %v573 = vmul.f32 %v571, %v572
  %v574 = vsub.f32 1.0, %v573
  %v575 = vmul.f32 %v572, %v574
  %v576 = vadd.f32 %v572, %v575
  %vm577 = vweird.f32 %v571
  %vm578 = vweird.f32 %v572
  %vm579 = vmor %vm577, %vm578
  %v580 = vsel %vm579, %v572, %v576
  %v581 = vand.u32 2147483647, %v571
  %vm582 = vcmp.eq.f32.partialorder %v581, 8.507059e+37
  %v583 = vand.u32 %v571, 2147483648
  %v584 = vor.u32 1.1754944e-38, %v583
  %v585 = vsel %vm582, %v584, %v580
  %v586 = vmul.f32 1.0, %v585
  %v587 = vrot.slane %v545, 4
  %v589 = vtanh.pop %v587
  %v590 = vrot.slane %v545, 6
  %v592 = vxor.u32 %v590, 2147483648
  %v593 = vmul.f32 %v592, 1.442695
  %v594 = vpow.pop %v593
  %v595 = vadd.f32 %v594, 1.0
  %v596 = vrcp.pop %v595
  %v597 = vmul.f32 %v595, %v596
  %v598 = vsub.f32 1.0, %v597
  %v599 = vmul.f32 %v596, %v598
  %v600 = vadd.f32 %v596, %v599
  %vm601 = vweird.f32 %v595
  %vm602 = vweird.f32 %v596
  %vm603 = vmor %vm601, %vm602
  %v604 = vsel %vm603, %v596, %v600
  %v605 = vand.u32 2147483647, %v595
  %vm606 = vcmp.eq.f32.partialorder %v605, 8.507059e+37
  %v607 = vand.u32 %v595, 2147483648
  %v608 = vor.u32 1.1754944e-38, %v607
  %v609 = vsel %vm606, %v608, %v604
  %v610 = vmul.f32 1.0, %v609
  %v611 = vmul.f32 %v586, %v476
  %v612 = vmul.f32 %v564, %v589
  %v613 = vadd.f32 %v611, %v612
  %v614 = vtanh.pop %v613
  %v615 = vmul.f32 %v610, %v614
  %s616 = scalar_lea.vmem %s0, 24
  %v617 = vld [vmem:[%s616] sm:$0xff]
  %v618 = vpack.c.bf16 %v615, %v615
  %619 = vmatpush.bf16.msra.mxu0 %v169
  %620 = vmatpush.bf16.msra.mxu0 %v165
  %621 = vmatpush.bf16.msra.mxu0 %v161
  %622 = vmatpush.bf16.msra.mxu0 %v157
  %623 = vmatpush.bf16.msra.mxu0 %v153
  %624 = vmatpush.bf16.msra.mxu0 %v149
  %625 = vmatpush.bf16.msra.mxu0 %v145
  %626 = vmatpush.bf16.msra.mxu0 %v141
  %627 = vmatmul.bf16.gmra.mxu0 %v618
  %v628 = vpop.f32.mrf.mxu0
  %v629 = vadd.f32 0.0, %v628
  %v630 = vpop.f32.mrf.mxu0
  %631 = vdwg.mxu0
  %632 = vmatpush.bf16.msra.mxu0 %v170
  %633 = vmatpush.bf16.msra.mxu0 %v166
  %634 = vmatpush.bf16.msra.mxu0 %v162
  %635 = vmatpush.bf16.msra.mxu0 %v158
  %636 = vmatpush.bf16.msra.mxu0 %v154
  %637 = vmatpush.bf16.msra.mxu0 %v150
  %638 = vmatpush.bf16.msra.mxu0 %v146
  %639 = vmatpush.bf16.msra.mxu0 %v142
  %640 = vmatmul.bf16.gmra.mxu0 %v618
  %v641 = vpop.f32.mrf.mxu0
  %v642 = vadd.f32 0.0, %v641
  %v643 = vpop.f32.mrf.mxu0
  %644 = vdwg.mxu0
  %645 = vmatpush.bf16.msra.mxu0 %v171
  %646 = vmatpush.bf16.msra.mxu0 %v167
  %647 = vmatpush.bf16.msra.mxu0 %v163
  %648 = vmatpush.bf16.msra.mxu0 %v159
  %649 = vmatpush.bf16.msra.mxu0 %v155
  %650 = vmatpush.bf16.msra.mxu0 %v151
  %651 = vmatpush.bf16.msra.mxu0 %v147
  %652 = vmatpush.bf16.msra.mxu0 %v143
  %653 = vmatmul.bf16.gmra.mxu0 %v618
  %v654 = vpop.f32.mrf.mxu0
  %v655 = vadd.f32 0.0, %v654
  %v656 = vpop.f32.mrf.mxu0
  %657 = vdwg.mxu0
  %658 = vmatpush.bf16.msra.mxu0 %v172
  %659 = vmatpush.bf16.msra.mxu0 %v168
  %660 = vmatpush.bf16.msra.mxu0 %v164
  %661 = vmatpush.bf16.msra.mxu0 %v160
  %662 = vmatpush.bf16.msra.mxu0 %v156
  %663 = vmatpush.bf16.msra.mxu0 %v152
  %664 = vmatpush.bf16.msra.mxu0 %v148
  %665 = vmatpush.bf16.msra.mxu0 %v144
  %666 = vmatmul.bf16.gmra.mxu0 %v618
  %v667 = vpop.f32.mrf.mxu0
  %v668 = vadd.f32 0.0, %v667
  %v669 = vpop.f32.mrf.mxu0
  %670 = vdwg.mxu0
  %v675 = vrot.slane %v642, 6
  %v676 = vrot.slane %v655, 4
  %v677 = vrot.slane %v668, 2
  %v678 = vsel %vm264, %v629, %v675
  %v679 = vsel %vm266, %v676, %v677
  %v680 = vsel %vm268, %v678, %v679
  %v682 = vadd.f32 %v617, %v680
  %v683 = vxor.u32 %v682, 2147483648
  %v684 = vmul.f32 %v683, 1.442695
  %v685 = vpow.pop %v684
  %v686 = vadd.f32 %v685, 1.0
  %v687 = vrcp.pop %v686
  %v688 = vmul.f32 %v686, %v687
  %v689 = vsub.f32 1.0, %v688
  %v690 = vmul.f32 %v687, %v689
  %v691 = vadd.f32 %v687, %v690
  %vm692 = vweird.f32 %v686
  %vm693 = vweird.f32 %v687
  %vm694 = vmor %vm692, %vm693
  %v695 = vsel %vm694, %v687, %v691
  %v696 = vand.u32 2147483647, %v686
  %vm697 = vcmp.eq.f32.partialorder %v696, 8.507059e+37
  %v698 = vand.u32 %v686, 2147483648
  %v699 = vor.u32 1.1754944e-38, %v698
  %v700 = vsel %vm697, %v699, %v695
  %v701 = vmul.f32 1.0, %v700
  %v703 = vrot.slane %v682, 2
  %v705 = vxor.u32 %v703, 2147483648
  %v706 = vmul.f32 %v705, 1.442695
  %v707 = vpow.pop %v706
  %v708 = vadd.f32 %v707, 1.0
  %v709 = vrcp.pop %v708
  %v710 = vmul.f32 %v708, %v709
  %v711 = vsub.f32 1.0, %v710
  %v712 = vmul.f32 %v709, %v711
  %v713 = vadd.f32 %v709, %v712
  %vm714 = vweird.f32 %v708
  %vm715 = vweird.f32 %v709
  %vm716 = vmor %vm714, %vm715
  %v717 = vsel %vm716, %v709, %v713
  %v718 = vand.u32 2147483647, %v708
  %vm719 = vcmp.eq.f32.partialorder %v718, 8.507059e+37
  %v720 = vand.u32 %v708, 2147483648
  %v721 = vor.u32 1.1754944e-38, %v720
  %v722 = vsel %vm719, %v721, %v717
  %v723 = vmul.f32 1.0, %v722
  %v724 = vrot.slane %v682, 4
  %v726 = vtanh.pop %v724
  %v727 = vrot.slane %v682, 6
  %v729 = vxor.u32 %v727, 2147483648
  %v730 = vmul.f32 %v729, 1.442695
  %v731 = vpow.pop %v730
  %v732 = vadd.f32 %v731, 1.0
  %v733 = vrcp.pop %v732
  %v734 = vmul.f32 %v732, %v733
  %v735 = vsub.f32 1.0, %v734
  %v736 = vmul.f32 %v733, %v735
  %v737 = vadd.f32 %v733, %v736
  %vm738 = vweird.f32 %v732
  %vm739 = vweird.f32 %v733
  %vm740 = vmor %vm738, %vm739
  %v741 = vsel %vm740, %v733, %v737
  %v742 = vand.u32 2147483647, %v732
  %vm743 = vcmp.eq.f32.partialorder %v742, 8.507059e+37
  %v744 = vand.u32 %v732, 2147483648
  %v745 = vor.u32 1.1754944e-38, %v744
  %v746 = vsel %vm743, %v745, %v741
  %v747 = vmul.f32 1.0, %v746
  %v748 = vmul.f32 %v723, %v613
  %v749 = vmul.f32 %v701, %v726
  %v750 = vadd.f32 %v748, %v749
  %v751 = vtanh.pop %v750
  %v752 = vmul.f32 %v747, %v751
  %s753 = scalar_lea.vmem %s0, 32
  %v754 = vld [vmem:[%s753] sm:$0xff]
  %v755 = vpack.c.bf16 %v752, %v752
  %756 = vmatpush.bf16.msra.mxu0 %v169
  %757 = vmatpush.bf16.msra.mxu0 %v165
  %758 = vmatpush.bf16.msra.mxu0 %v161
  %759 = vmatpush.bf16.msra.mxu0 %v157
  %760 = vmatpush.bf16.msra.mxu0 %v153
  %761 = vmatpush.bf16.msra.mxu0 %v149
  %762 = vmatpush.bf16.msra.mxu0 %v145
  %763 = vmatpush.bf16.msra.mxu0 %v141
  %764 = vmatmul.bf16.gmra.mxu0 %v755
  %v765 = vpop.f32.mrf.mxu0
  %v766 = vadd.f32 0.0, %v765
  %v767 = vpop.f32.mrf.mxu0
  %768 = vdwg.mxu0
  %769 = vmatpush.bf16.msra.mxu0 %v170
  %770 = vmatpush.bf16.msra.mxu0 %v166
  %771 = vmatpush.bf16.msra.mxu0 %v162
  %772 = vmatpush.bf16.msra.mxu0 %v158
  %773 = vmatpush.bf16.msra.mxu0 %v154
  %774 = vmatpush.bf16.msra.mxu0 %v150
  %775 = vmatpush.bf16.msra.mxu0 %v146
  %776 = vmatpush.bf16.msra.mxu0 %v142
  %777 = vmatmul.bf16.gmra.mxu0 %v755
  %v778 = vpop.f32.mrf.mxu0
  %v779 = vadd.f32 0.0, %v778
  %v780 = vpop.f32.mrf.mxu0
  %781 = vdwg.mxu0
  %782 = vmatpush.bf16.msra.mxu0 %v171
  %783 = vmatpush.bf16.msra.mxu0 %v167
  %784 = vmatpush.bf16.msra.mxu0 %v163
  %785 = vmatpush.bf16.msra.mxu0 %v159
  %786 = vmatpush.bf16.msra.mxu0 %v155
  %787 = vmatpush.bf16.msra.mxu0 %v151
  %788 = vmatpush.bf16.msra.mxu0 %v147
  %789 = vmatpush.bf16.msra.mxu0 %v143
  %790 = vmatmul.bf16.gmra.mxu0 %v755
  %v791 = vpop.f32.mrf.mxu0
  %v792 = vadd.f32 0.0, %v791
  %v793 = vpop.f32.mrf.mxu0
  %794 = vdwg.mxu0
  %795 = vmatpush.bf16.msra.mxu0 %v172
  %796 = vmatpush.bf16.msra.mxu0 %v168
  %797 = vmatpush.bf16.msra.mxu0 %v164
  %798 = vmatpush.bf16.msra.mxu0 %v160
  %799 = vmatpush.bf16.msra.mxu0 %v156
  %800 = vmatpush.bf16.msra.mxu0 %v152
  %801 = vmatpush.bf16.msra.mxu0 %v148
  %802 = vmatpush.bf16.msra.mxu0 %v144
  %803 = vmatmul.bf16.gmra.mxu0 %v755
  %v804 = vpop.f32.mrf.mxu0
  %v805 = vadd.f32 0.0, %v804
  %v806 = vpop.f32.mrf.mxu0
  %807 = vdwg.mxu0
  %v812 = vrot.slane %v779, 6
  %v813 = vrot.slane %v792, 4
  %v814 = vrot.slane %v805, 2
  %v815 = vsel %vm264, %v766, %v812
  %v816 = vsel %vm266, %v813, %v814
  %v817 = vsel %vm268, %v815, %v816
  %v819 = vadd.f32 %v754, %v817
  %v820 = vxor.u32 %v819, 2147483648
  %v821 = vmul.f32 %v820, 1.442695
  %v822 = vpow.pop %v821
  %v823 = vadd.f32 %v822, 1.0
  %v824 = vrcp.pop %v823
  %v825 = vmul.f32 %v823, %v824
  %v826 = vsub.f32 1.0, %v825
  %v827 = vmul.f32 %v824, %v826
  %v828 = vadd.f32 %v824, %v827
  %vm829 = vweird.f32 %v823
  %vm830 = vweird.f32 %v824
  %vm831 = vmor %vm829, %vm830
  %v832 = vsel %vm831, %v824, %v828
  %v833 = vand.u32 2147483647, %v823
  %vm834 = vcmp.eq.f32.partialorder %v833, 8.507059e+37
  %v835 = vand.u32 %v823, 2147483648
  %v836 = vor.u32 1.1754944e-38, %v835
  %v837 = vsel %vm834, %v836, %v832
  %v838 = vmul.f32 1.0, %v837
  %v840 = vrot.slane %v819, 2
  %v842 = vxor.u32 %v840, 2147483648
  %v843 = vmul.f32 %v842, 1.442695
  %v844 = vpow.pop %v843
  %v845 = vadd.f32 %v844, 1.0
  %v846 = vrcp.pop %v845
  %v847 = vmul.f32 %v845, %v846
  %v848 = vsub.f32 1.0, %v847
  %v849 = vmul.f32 %v846, %v848
  %v850 = vadd.f32 %v846, %v849
  %vm851 = vweird.f32 %v845
  %vm852 = vweird.f32 %v846
  %vm853 = vmor %vm851, %vm852
  %v854 = vsel %vm853, %v846, %v850
  %v855 = vand.u32 2147483647, %v845
  %vm856 = vcmp.eq.f32.partialorder %v855, 8.507059e+37
  %v857 = vand.u32 %v845, 2147483648
  %v858 = vor.u32 1.1754944e-38, %v857
  %v859 = vsel %vm856, %v858, %v854
  %v860 = vmul.f32 1.0, %v859
  %v861 = vrot.slane %v819, 4
  %v863 = vtanh.pop %v861
  %v864 = vrot.slane %v819, 6
  %v866 = vxor.u32 %v864, 2147483648
  %v867 = vmul.f32 %v866, 1.442695
  %v868 = vpow.pop %v867
  %v869 = vadd.f32 %v868, 1.0
  %v870 = vrcp.pop %v869
  %v871 = vmul.f32 %v869, %v870
  %v872 = vsub.f32 1.0, %v871
  %v873 = vmul.f32 %v870, %v872
  %v874 = vadd.f32 %v870, %v873
  %vm875 = vweird.f32 %v869
  %vm876 = vweird.f32 %v870
  %vm877 = vmor %vm875, %vm876
  %v878 = vsel %vm877, %v870, %v874
  %v879 = vand.u32 2147483647, %v869
  %vm880 = vcmp.eq.f32.partialorder %v879, 8.507059e+37
  %v881 = vand.u32 %v869, 2147483648
  %v882 = vor.u32 1.1754944e-38, %v881
  %v883 = vsel %vm880, %v882, %v878
  %v884 = vmul.f32 1.0, %v883
  %v885 = vmul.f32 %v860, %v750
  %v886 = vmul.f32 %v838, %v863
  %v887 = vadd.f32 %v885, %v886
  %v888 = vtanh.pop %v887
  %v889 = vmul.f32 %v884, %v888
  %s890 = scalar_lea.vmem %s0, 40
  %v891 = vld [vmem:[%s890] sm:$0xff]
  %v892 = vpack.c.bf16 %v889, %v889
  %893 = vmatpush.bf16.msra.mxu0 %v169
  %894 = vmatpush.bf16.msra.mxu0 %v165
  %895 = vmatpush.bf16.msra.mxu0 %v161
  %896 = vmatpush.bf16.msra.mxu0 %v157
  %897 = vmatpush.bf16.msra.mxu0 %v153
  %898 = vmatpush.bf16.msra.mxu0 %v149
  %899 = vmatpush.bf16.msra.mxu0 %v145
  %900 = vmatpush.bf16.msra.mxu0 %v141
  %901 = vmatmul.bf16.gmra.mxu0 %v892
  %v902 = vpop.f32.mrf.mxu0
  %v903 = vadd.f32 0.0, %v902
  %v904 = vpop.f32.mrf.mxu0
  %905 = vdwg.mxu0
  %906 = vmatpush.bf16.msra.mxu0 %v170
  %907 = vmatpush.bf16.msra.mxu0 %v166
  %908 = vmatpush.bf16.msra.mxu0 %v162
  %909 = vmatpush.bf16.msra.mxu0 %v158
  %910 = vmatpush.bf16.msra.mxu0 %v154
  %911 = vmatpush.bf16.msra.mxu0 %v150
  %912 = vmatpush.bf16.msra.mxu0 %v146
  %913 = vmatpush.bf16.msra.mxu0 %v142
  %914 = vmatmul.bf16.gmra.mxu0 %v892
  %v915 = vpop.f32.mrf.mxu0
  %v916 = vadd.f32 0.0, %v915
  %v917 = vpop.f32.mrf.mxu0
  %918 = vdwg.mxu0
  %919 = vmatpush.bf16.msra.mxu0 %v171
  %920 = vmatpush.bf16.msra.mxu0 %v167
  %921 = vmatpush.bf16.msra.mxu0 %v163
  %922 = vmatpush.bf16.msra.mxu0 %v159
  %923 = vmatpush.bf16.msra.mxu0 %v155
  %924 = vmatpush.bf16.msra.mxu0 %v151
  %925 = vmatpush.bf16.msra.mxu0 %v147
  %926 = vmatpush.bf16.msra.mxu0 %v143
  %927 = vmatmul.bf16.gmra.mxu0 %v892
  %v928 = vpop.f32.mrf.mxu0
  %v929 = vadd.f32 0.0, %v928
  %v930 = vpop.f32.mrf.mxu0
  %931 = vdwg.mxu0
  %932 = vmatpush.bf16.msra.mxu0 %v172
  %933 = vmatpush.bf16.msra.mxu0 %v168
  %934 = vmatpush.bf16.msra.mxu0 %v164
  %935 = vmatpush.bf16.msra.mxu0 %v160
  %936 = vmatpush.bf16.msra.mxu0 %v156
  %937 = vmatpush.bf16.msra.mxu0 %v152
  %938 = vmatpush.bf16.msra.mxu0 %v148
  %939 = vmatpush.bf16.msra.mxu0 %v144
  %940 = vmatmul.bf16.gmra.mxu0 %v892
  %v941 = vpop.f32.mrf.mxu0
  %v942 = vadd.f32 0.0, %v941
  %v943 = vpop.f32.mrf.mxu0
  %944 = vdwg.mxu0
  %v949 = vrot.slane %v916, 6
  %v950 = vrot.slane %v929, 4
  %v951 = vrot.slane %v942, 2
  %v952 = vsel %vm264, %v903, %v949
  %v953 = vsel %vm266, %v950, %v951
  %v954 = vsel %vm268, %v952, %v953
  %v956 = vadd.f32 %v891, %v954
  %v957 = vxor.u32 %v956, 2147483648
  %v958 = vmul.f32 %v957, 1.442695
  %v959 = vpow.pop %v958
  %v960 = vadd.f32 %v959, 1.0
  %v961 = vrcp.pop %v960
  %v962 = vmul.f32 %v960, %v961
  %v963 = vsub.f32 1.0, %v962
  %v964 = vmul.f32 %v961, %v963
  %v965 = vadd.f32 %v961, %v964
  %vm966 = vweird.f32 %v960
  %vm967 = vweird.f32 %v961
  %vm968 = vmor %vm966, %vm967
  %v969 = vsel %vm968, %v961, %v965
  %v970 = vand.u32 2147483647, %v960
  %vm971 = vcmp.eq.f32.partialorder %v970, 8.507059e+37
  %v972 = vand.u32 %v960, 2147483648
  %v973 = vor.u32 1.1754944e-38, %v972
  %v974 = vsel %vm971, %v973, %v969
  %v975 = vmul.f32 1.0, %v974
  %v977 = vrot.slane %v956, 2
  %v979 = vxor.u32 %v977, 2147483648
  %v980 = vmul.f32 %v979, 1.442695
  %v981 = vpow.pop %v980
  %v982 = vadd.f32 %v981, 1.0
  %v983 = vrcp.pop %v982
  %v984 = vmul.f32 %v982, %v983
  %v985 = vsub.f32 1.0, %v984
  %v986 = vmul.f32 %v983, %v985
  %v987 = vadd.f32 %v983, %v986
  %vm988 = vweird.f32 %v982
  %vm989 = vweird.f32 %v983
  %vm990 = vmor %vm988, %vm989
  %v991 = vsel %vm990, %v983, %v987
  %v992 = vand.u32 2147483647, %v982
  %vm993 = vcmp.eq.f32.partialorder %v992, 8.507059e+37
  %v994 = vand.u32 %v982, 2147483648
  %v995 = vor.u32 1.1754944e-38, %v994
  %v996 = vsel %vm993, %v995, %v991
  %v997 = vmul.f32 1.0, %v996
  %v998 = vrot.slane %v956, 4
  %v1000 = vtanh.pop %v998
  %v1001 = vrot.slane %v956, 6
  %v1003 = vxor.u32 %v1001, 2147483648
  %v1004 = vmul.f32 %v1003, 1.442695
  %v1005 = vpow.pop %v1004
  %v1006 = vadd.f32 %v1005, 1.0
  %v1007 = vrcp.pop %v1006
  %v1008 = vmul.f32 %v1006, %v1007
  %v1009 = vsub.f32 1.0, %v1008
  %v1010 = vmul.f32 %v1007, %v1009
  %v1011 = vadd.f32 %v1007, %v1010
  %vm1012 = vweird.f32 %v1006
  %vm1013 = vweird.f32 %v1007
  %vm1014 = vmor %vm1012, %vm1013
  %v1015 = vsel %vm1014, %v1007, %v1011
  %v1016 = vand.u32 2147483647, %v1006
  %vm1017 = vcmp.eq.f32.partialorder %v1016, 8.507059e+37
  %v1018 = vand.u32 %v1006, 2147483648
  %v1019 = vor.u32 1.1754944e-38, %v1018
  %v1020 = vsel %vm1017, %v1019, %v1015
  %v1021 = vmul.f32 1.0, %v1020
  %v1022 = vmul.f32 %v997, %v887
  %v1023 = vmul.f32 %v975, %v1000
  %v1024 = vadd.f32 %v1022, %v1023
  %v1025 = vtanh.pop %v1024
  %v1026 = vmul.f32 %v1021, %v1025
  %s1027 = scalar_lea.vmem %s0, 48
  %v1028 = vld [vmem:[%s1027] sm:$0xff]
  %v1029 = vpack.c.bf16 %v1026, %v1026
  %1030 = vmatpush.bf16.msra.mxu0 %v169
  %1031 = vmatpush.bf16.msra.mxu0 %v165
  %1032 = vmatpush.bf16.msra.mxu0 %v161
  %1033 = vmatpush.bf16.msra.mxu0 %v157
  %1034 = vmatpush.bf16.msra.mxu0 %v153
  %1035 = vmatpush.bf16.msra.mxu0 %v149
  %1036 = vmatpush.bf16.msra.mxu0 %v145
  %1037 = vmatpush.bf16.msra.mxu0 %v141
  %1038 = vmatmul.bf16.gmra.mxu0 %v1029
  %v1039 = vpop.f32.mrf.mxu0
  %v1040 = vadd.f32 0.0, %v1039
  %v1041 = vpop.f32.mrf.mxu0
  %1042 = vdwg.mxu0
  %1043 = vmatpush.bf16.msra.mxu0 %v170
  %1044 = vmatpush.bf16.msra.mxu0 %v166
  %1045 = vmatpush.bf16.msra.mxu0 %v162
  %1046 = vmatpush.bf16.msra.mxu0 %v158
  %1047 = vmatpush.bf16.msra.mxu0 %v154
  %1048 = vmatpush.bf16.msra.mxu0 %v150
  %1049 = vmatpush.bf16.msra.mxu0 %v146
  %1050 = vmatpush.bf16.msra.mxu0 %v142
  %1051 = vmatmul.bf16.gmra.mxu0 %v1029
  %v1052 = vpop.f32.mrf.mxu0
  %v1053 = vadd.f32 0.0, %v1052
  %v1054 = vpop.f32.mrf.mxu0
  %1055 = vdwg.mxu0
  %1056 = vmatpush.bf16.msra.mxu0 %v171
  %1057 = vmatpush.bf16.msra.mxu0 %v167
  %1058 = vmatpush.bf16.msra.mxu0 %v163
  %1059 = vmatpush.bf16.msra.mxu0 %v159
  %1060 = vmatpush.bf16.msra.mxu0 %v155
  %1061 = vmatpush.bf16.msra.mxu0 %v151
  %1062 = vmatpush.bf16.msra.mxu0 %v147
  %1063 = vmatpush.bf16.msra.mxu0 %v143
  %1064 = vmatmul.bf16.gmra.mxu0 %v1029
  %v1065 = vpop.f32.mrf.mxu0
  %v1066 = vadd.f32 0.0, %v1065
  %v1067 = vpop.f32.mrf.mxu0
  %1068 = vdwg.mxu0
  %1069 = vmatpush.bf16.msra.mxu0 %v172
  %1070 = vmatpush.bf16.msra.mxu0 %v168
  %1071 = vmatpush.bf16.msra.mxu0 %v164
  %1072 = vmatpush.bf16.msra.mxu0 %v160
  %1073 = vmatpush.bf16.msra.mxu0 %v156
  %1074 = vmatpush.bf16.msra.mxu0 %v152
  %1075 = vmatpush.bf16.msra.mxu0 %v148
  %1076 = vmatpush.bf16.msra.mxu0 %v144
  %1077 = vmatmul.bf16.gmra.mxu0 %v1029
  %v1078 = vpop.f32.mrf.mxu0
  %v1079 = vadd.f32 0.0, %v1078
  %v1080 = vpop.f32.mrf.mxu0
  %1081 = vdwg.mxu0
  %v1086 = vrot.slane %v1053, 6
  %v1087 = vrot.slane %v1066, 4
  %v1088 = vrot.slane %v1079, 2
  %v1089 = vsel %vm264, %v1040, %v1086
  %v1090 = vsel %vm266, %v1087, %v1088
  %v1091 = vsel %vm268, %v1089, %v1090
  %v1093 = vadd.f32 %v1028, %v1091
  %v1094 = vxor.u32 %v1093, 2147483648
  %v1095 = vmul.f32 %v1094, 1.442695
  %v1096 = vpow.pop %v1095
  %v1097 = vadd.f32 %v1096, 1.0
  %v1098 = vrcp.pop %v1097
  %v1099 = vmul.f32 %v1097, %v1098
  %v1100 = vsub.f32 1.0, %v1099
  %v1101 = vmul.f32 %v1098, %v1100
  %v1102 = vadd.f32 %v1098, %v1101
  %vm1103 = vweird.f32 %v1097
  %vm1104 = vweird.f32 %v1098
  %vm1105 = vmor %vm1103, %vm1104
  %v1106 = vsel %vm1105, %v1098, %v1102
  %v1107 = vand.u32 2147483647, %v1097
  %vm1108 = vcmp.eq.f32.partialorder %v1107, 8.507059e+37
  %v1109 = vand.u32 %v1097, 2147483648
  %v1110 = vor.u32 1.1754944e-38, %v1109
  %v1111 = vsel %vm1108, %v1110, %v1106
  %v1112 = vmul.f32 1.0, %v1111
  %v1114 = vrot.slane %v1093, 2
  %v1116 = vxor.u32 %v1114, 2147483648
  %v1117 = vmul.f32 %v1116, 1.442695
  %v1118 = vpow.pop %v1117
  %v1119 = vadd.f32 %v1118, 1.0
  %v1120 = vrcp.pop %v1119
  %v1121 = vmul.f32 %v1119, %v1120
  %v1122 = vsub.f32 1.0, %v1121
  %v1123 = vmul.f32 %v1120, %v1122
  %v1124 = vadd.f32 %v1120, %v1123
  %vm1125 = vweird.f32 %v1119
  %vm1126 = vweird.f32 %v1120
  %vm1127 = vmor %vm1125, %vm1126
  %v1128 = vsel %vm1127, %v1120, %v1124
  %v1129 = vand.u32 2147483647, %v1119
  %vm1130 = vcmp.eq.f32.partialorder %v1129, 8.507059e+37
  %v1131 = vand.u32 %v1119, 2147483648
  %v1132 = vor.u32 1.1754944e-38, %v1131
  %v1133 = vsel %vm1130, %v1132, %v1128
  %v1134 = vmul.f32 1.0, %v1133
  %v1135 = vrot.slane %v1093, 4
  %v1137 = vtanh.pop %v1135
  %v1138 = vrot.slane %v1093, 6
  %v1140 = vxor.u32 %v1138, 2147483648
  %v1141 = vmul.f32 %v1140, 1.442695
  %v1142 = vpow.pop %v1141
  %v1143 = vadd.f32 %v1142, 1.0
  %v1144 = vrcp.pop %v1143
  %v1145 = vmul.f32 %v1143, %v1144
  %v1146 = vsub.f32 1.0, %v1145
  %v1147 = vmul.f32 %v1144, %v1146
  %v1148 = vadd.f32 %v1144, %v1147
  %vm1149 = vweird.f32 %v1143
  %vm1150 = vweird.f32 %v1144
  %vm1151 = vmor %vm1149, %vm1150
  %v1152 = vsel %vm1151, %v1144, %v1148
  %v1153 = vand.u32 2147483647, %v1143
  %vm1154 = vcmp.eq.f32.partialorder %v1153, 8.507059e+37
  %v1155 = vand.u32 %v1143, 2147483648
  %v1156 = vor.u32 1.1754944e-38, %v1155
  %v1157 = vsel %vm1154, %v1156, %v1152
  %v1158 = vmul.f32 1.0, %v1157
  %v1159 = vmul.f32 %v1134, %v1024
  %v1160 = vmul.f32 %v1112, %v1137
  %v1161 = vadd.f32 %v1159, %v1160
  %v1162 = vtanh.pop %v1161
  %v1163 = vmul.f32 %v1158, %v1162
  %s1164 = scalar_lea.vmem %s0, 56
  %v1165 = vld [vmem:[%s1164] sm:$0xff]
  %v1166 = vpack.c.bf16 %v1163, %v1163
  %1167 = vmatpush.bf16.msra.mxu0 %v169
  %1168 = vmatpush.bf16.msra.mxu0 %v165
  %1169 = vmatpush.bf16.msra.mxu0 %v161
  %1170 = vmatpush.bf16.msra.mxu0 %v157
  %1171 = vmatpush.bf16.msra.mxu0 %v153
  %1172 = vmatpush.bf16.msra.mxu0 %v149
  %1173 = vmatpush.bf16.msra.mxu0 %v145
  %1174 = vmatpush.bf16.msra.mxu0 %v141
  %1175 = vmatmul.bf16.gmra.mxu0 %v1166
  %v1176 = vpop.f32.mrf.mxu0
  %v1177 = vadd.f32 0.0, %v1176
  %v1178 = vpop.f32.mrf.mxu0
  %1179 = vdwg.mxu0
  %1180 = vmatpush.bf16.msra.mxu0 %v170
  %1181 = vmatpush.bf16.msra.mxu0 %v166
  %1182 = vmatpush.bf16.msra.mxu0 %v162
  %1183 = vmatpush.bf16.msra.mxu0 %v158
  %1184 = vmatpush.bf16.msra.mxu0 %v154
  %1185 = vmatpush.bf16.msra.mxu0 %v150
  %1186 = vmatpush.bf16.msra.mxu0 %v146
  %1187 = vmatpush.bf16.msra.mxu0 %v142
  %1188 = vmatmul.bf16.gmra.mxu0 %v1166
  %v1189 = vpop.f32.mrf.mxu0
  %v1190 = vadd.f32 0.0, %v1189
  %v1191 = vpop.f32.mrf.mxu0
  %1192 = vdwg.mxu0
  %1193 = vmatpush.bf16.msra.mxu0 %v171
  %1194 = vmatpush.bf16.msra.mxu0 %v167
  %1195 = vmatpush.bf16.msra.mxu0 %v163
  %1196 = vmatpush.bf16.msra.mxu0 %v159
  %1197 = vmatpush.bf16.msra.mxu0 %v155
  %1198 = vmatpush.bf16.msra.mxu0 %v151
  %1199 = vmatpush.bf16.msra.mxu0 %v147
  %1200 = vmatpush.bf16.msra.mxu0 %v143
  %1201 = vmatmul.bf16.gmra.mxu0 %v1166
  %v1202 = vpop.f32.mrf.mxu0
  %v1203 = vadd.f32 0.0, %v1202
  %v1204 = vpop.f32.mrf.mxu0
  %1205 = vdwg.mxu0
  %1206 = vmatpush.bf16.msra.mxu0 %v172
  %1207 = vmatpush.bf16.msra.mxu0 %v168
  %1208 = vmatpush.bf16.msra.mxu0 %v164
  %1209 = vmatpush.bf16.msra.mxu0 %v160
  %1210 = vmatpush.bf16.msra.mxu0 %v156
  %1211 = vmatpush.bf16.msra.mxu0 %v152
  %1212 = vmatpush.bf16.msra.mxu0 %v148
  %1213 = vmatpush.bf16.msra.mxu0 %v144
  %1214 = vmatmul.bf16.gmra.mxu0 %v1166
  %v1215 = vpop.f32.mrf.mxu0
  %v1216 = vadd.f32 0.0, %v1215
  %v1217 = vpop.f32.mrf.mxu0
  %1218 = vdwg.mxu0
  %v1223 = vrot.slane %v1190, 6
  %v1224 = vrot.slane %v1203, 4
  %v1225 = vrot.slane %v1216, 2
  %v1226 = vsel %vm264, %v1177, %v1223
  %v1227 = vsel %vm266, %v1224, %v1225
  %v1228 = vsel %vm268, %v1226, %v1227
  %v1230 = vadd.f32 %v1165, %v1228
  %v1231 = vxor.u32 %v1230, 2147483648
  %v1232 = vmul.f32 %v1231, 1.442695
  %v1233 = vpow.pop %v1232
  %v1234 = vadd.f32 %v1233, 1.0
  %v1235 = vrcp.pop %v1234
  %v1236 = vmul.f32 %v1234, %v1235
  %v1237 = vsub.f32 1.0, %v1236
  %v1238 = vmul.f32 %v1235, %v1237
  %v1239 = vadd.f32 %v1235, %v1238
  %vm1240 = vweird.f32 %v1234
  %vm1241 = vweird.f32 %v1235
  %vm1242 = vmor %vm1240, %vm1241
  %v1243 = vsel %vm1242, %v1235, %v1239
  %v1244 = vand.u32 2147483647, %v1234
  %vm1245 = vcmp.eq.f32.partialorder %v1244, 8.507059e+37
  %v1246 = vand.u32 %v1234, 2147483648
  %v1247 = vor.u32 1.1754944e-38, %v1246
  %v1248 = vsel %vm1245, %v1247, %v1243
  %v1249 = vmul.f32 1.0, %v1248
  %v1251 = vrot.slane %v1230, 2
  %v1253 = vxor.u32 %v1251, 2147483648
  %v1254 = vmul.f32 %v1253, 1.442695
  %v1255 = vpow.pop %v1254
  %v1256 = vadd.f32 %v1255, 1.0
  %v1257 = vrcp.pop %v1256
  %v1258 = vmul.f32 %v1256, %v1257
  %v1259 = vsub.f32 1.0, %v1258
  %v1260 = vmul.f32 %v1257, %v1259
  %v1261 = vadd.f32 %v1257, %v1260
  %vm1262 = vweird.f32 %v1256
  %vm1263 = vweird.f32 %v1257
  %vm1264 = vmor %vm1262, %vm1263
  %v1265 = vsel %vm1264, %v1257, %v1261
  %v1266 = vand.u32 2147483647, %v1256
  %vm1267 = vcmp.eq.f32.partialorder %v1266, 8.507059e+37
  %v1268 = vand.u32 %v1256, 2147483648
  %v1269 = vor.u32 1.1754944e-38, %v1268
  %v1270 = vsel %vm1267, %v1269, %v1265
  %v1271 = vmul.f32 1.0, %v1270
  %v1272 = vrot.slane %v1230, 4
  %v1274 = vtanh.pop %v1272
  %v1275 = vrot.slane %v1230, 6
  %v1277 = vxor.u32 %v1275, 2147483648
  %v1278 = vmul.f32 %v1277, 1.442695
  %v1279 = vpow.pop %v1278
  %v1280 = vadd.f32 %v1279, 1.0
  %v1281 = vrcp.pop %v1280
  %v1282 = vmul.f32 %v1280, %v1281
  %v1283 = vsub.f32 1.0, %v1282
  %v1284 = vmul.f32 %v1281, %v1283
  %v1285 = vadd.f32 %v1281, %v1284
  %vm1286 = vweird.f32 %v1280
  %vm1287 = vweird.f32 %v1281
  %vm1288 = vmor %vm1286, %vm1287
  %v1289 = vsel %vm1288, %v1281, %v1285
  %v1290 = vand.u32 2147483647, %v1280
  %vm1291 = vcmp.eq.f32.partialorder %v1290, 8.507059e+37
  %v1292 = vand.u32 %v1280, 2147483648
  %v1293 = vor.u32 1.1754944e-38, %v1292
  %v1294 = vsel %vm1291, %v1293, %v1289
  %v1295 = vmul.f32 1.0, %v1294
  %v1296 = vmul.f32 %v1271, %v1161
  %v1297 = vmul.f32 %v1249, %v1274
  %v1298 = vadd.f32 %v1296, %v1297
  %v1299 = vtanh.pop %v1298
  %v1300 = vmul.f32 %v1295, %v1299
  %1301 = vst [vmem:[%s2] sm:$0x3] %v1300
  // Predicated region
  $region10: #{detector_forward.1} parent=0 // pred_check
    _
  $region11: #{detector_forward.1} parent=0 // pred_check_branch
    %1303 = sbr.rel (0) target = $region13
  $region12: #{detector_forward.1} parent=0 // pred_region
    _
  $region13: #{detector_forward.1} parent=0 // pred_fallthru
    _
  // Predicated region
  $region14: #{detector_forward.1} parent=0 // pred_check
    _
  $region15: #{detector_forward.1} parent=0 // pred_check_branch
    %1305 = sbr.rel (0) target = $region17
  $region16: #{detector_forward.1} parent=0 // pred_region
    _
  $region17: #{detector_forward.1} parent=0 // pred_fallthru
    _

</llo_original>
